<compile_context>
chip_gen: v5e
topology: v5e:2x2
jax: 0.10.0
libtpu: 0.0.40
codegen_flags: <defaults>
</compile_context>

<pallas_src>
import math
import functools

import jax
import jax.numpy as jnp
from jax.experimental import pallas as pl
from jax.experimental.pallas import tpu as pltpu

# ----------------------------- config (small) -------------------------------
VOCAB = 64
EMBED = 32
NHEADS = 4
HEAD_DIM = EMBED // NHEADS
N_LAYERS = 2
SEQ = 8
BATCH = 2
NORM_EPS = 1e-6
_ff = int(2 * (4 * EMBED) / 3)
FF_HIDDEN = 256 * ((_ff + 255) // 256)          # -> 256
VPAD = 128                                      # lane-dense padded output width

# --- packed-slab lane offsets (all multiples of 128 -> lane-aligned views) ---
QKVW_OFF = 0            # width 3*EMBED = 96
FCW_OFF = 128           # width EMBED   = 32
W12_OFF = 256           # width 2*FF    = 512
WIN_WIDTH = 768

ANW_OFF = 0             # width 32
FFNW_OFF = 128          # width 32
PE_OFF = 256            # width 32
QKVB_OFF = 384          # width 96
FCB_OFF = 512           # width 32
B12_OFF = 640           # width 512
BO_OFF = 1152           # width 32
VEC_WIDTH = 1280

GNORM_OFF = 0           # width 32
GOUTB_OFF = 128         # width VPAD
GVEC_WIDTH = 256


# ----------------------------- kernel helpers -------------------------------
def _rmsnorm(x, w, eps):
    # x: (N, D) f32, w: (1, D) f32
    ms = jnp.mean(x * x, axis=-1, keepdims=True)
    return w * (x * jax.lax.rsqrt(ms + eps))


def fused_forward_kernel(tok_ref, emb_ref, win_ref, wo_ref, vec_ref, outw_ref,
                         gvec_ref, o_ref, *, n_layers, nheads, head_dim, eps,
                         seq, batch, ff_hidden):
    """Whole forward pass: embed -> N transformer blocks -> norm -> logits."""
    e = nheads * head_dim
    bs = batch * seq
    vocab = emb_ref.shape[0]
    scale = 1.0 / math.sqrt(head_dim)
    bf16 = jnp.bfloat16

    # ---- embedding gather as one-hot matmul (keeps everything in one kernel) ----
    tok = tok_ref[...]                                             # (BS, 1) int32
    cols = jax.lax.broadcasted_iota(jnp.int32, (bs, vocab), 1)
    onehot = (cols == tok).astype(bf16)                            # exact 0/1 in bf16
    h = jnp.dot(onehot, emb_ref[...], preferred_element_type=jnp.float32)  # (BS, E) f32

    for l in range(n_layers):                                      # static unroll
        # ---- unpack packed slabs with static, lane-aligned views (zero cost) ----
        qkvw = win_ref[l, :, QKVW_OFF:QKVW_OFF + 3 * e]            # (E, 3E)  bf16
        fcw = win_ref[l, :, FCW_OFF:FCW_OFF + e]                   # (E, E)   bf16
        w12 = win_ref[l, :, W12_OFF:W12_OFF + 2 * ff_hidden]       # (E, 2FF) bf16
        wo = wo_ref[l]                                             # (FF, E)  bf16
        anw = vec_ref[l:l + 1, ANW_OFF:ANW_OFF + e]                # (1, E)   f32
        ffnw = vec_ref[l:l + 1, FFNW_OFF:FFNW_OFF + e]
        pe = vec_ref[l:l + 1, PE_OFF:PE_OFF + e]
        qkvb = vec_ref[l:l + 1, QKVB_OFF:QKVB_OFF + 3 * e]
        fcb = vec_ref[l:l + 1, FCB_OFF:FCB_OFF + e]
        b12 = vec_ref[l:l + 1, B12_OFF:B12_OFF + 2 * ff_hidden]
        bo = vec_ref[l:l + 1, BO_OFF:BO_OFF + e]

        # ---- attention branch: h = h + fc(MHA(rmsnorm(h))) ----
        xn = _rmsnorm(h, anw, eps)
        qkv = jnp.dot(xn.astype(bf16), qkvw,
                      preferred_element_type=jnp.float32) + qkvb   # (BS, 3E) f32
        q = (qkv[:, 0:e] + pe) * scale                             # scale folded into q
        k = qkv[:, e:2 * e] + pe
        v = qkv[:, 2 * e:3 * e]

        # (BS, E) -> (B, S, E): pure sublane split, cheap.  Per-head batched einsums
        # stay in vregs (no VMEM scratch, no masked stores, no explicit k.T).
        q3 = q.reshape(batch, seq, e)
        k3 = k.reshape(batch, seq, e)
        v3 = v.reshape(batch, seq, e)

        head_outs = []
        for hh in range(nheads):                                   # 4 tiny batched matmuls
            lo = hh * head_dim
            qh = q3[:, :, lo:lo + head_dim]
            kh = k3[:, :, lo:lo + head_dim]
            vh = v3[:, :, lo:lo + head_dim]
            s = jnp.einsum('bqd,bkd->bqk', qh, kh,
                           preferred_element_type=jnp.float32)     # (B, S, S)
            s = s - jnp.max(s, axis=-1, keepdims=True)             # unmasked softmax
            p = jnp.exp(s)
            p = p * pl.reciprocal(jnp.sum(p, axis=-1, keepdims=True), approx=True)
            head_outs.append(jnp.einsum('bqk,bkd->bqd', p, vh,
                                        preferred_element_type=jnp.float32))
        attn = jnp.concatenate(head_outs, axis=-1).reshape(bs, e)  # (BS, E) f32

        attn = jnp.dot(attn.astype(bf16), fcw,
                       preferred_element_type=jnp.float32) + fcb
        h = h + attn

        # ---- feed-forward branch: h = h + wo(silu(w1 hn) * (w2 hn)) ----
        hn = _rmsnorm(h, ffnw, eps)
        ab = jnp.dot(hn.astype(bf16), w12,
                     preferred_element_type=jnp.float32) + b12     # (BS, 2FF)
        a = ab[:, :ff_hidden]
        g = ab[:, ff_hidden:]
        act = a * jax.nn.sigmoid(a) * g                            # SiLU(a) * g
        h = h + jnp.dot(act.astype(bf16), wo,
                        preferred_element_type=jnp.float32) + bo

    # ---- final RMSNorm + lane-dense (zero-padded) output projection ----
    norm_w = gvec_ref[0:1, GNORM_OFF:GNORM_OFF + e]
    out_b = gvec_ref[0:1, GOUTB_OFF:]
    xn = _rmsnorm(h, norm_w, eps)
    o_ref[...] = jnp.dot(xn.astype(bf16), outw_ref[...],
                         preferred_element_type=jnp.float32) + out_b


# ----------------------------- pallas wrapper --------------------------------
def transformer_forward(tok2d, emb, win, wo, vecs, outw, gvec):
    """tok2d: (B*S, 1) int32; weights already packed (see pack_params)."""
    bs = tok2d.shape[0]
    kernel = functools.partial(
        fused_forward_kernel, n_layers=win.shape[0], nheads=NHEADS,
        head_dim=HEAD_DIM, eps=NORM_EPS, seq=SEQ, batch=bs // SEQ,
        ff_hidden=FF_HIDDEN)

    return pl.pallas_call(
        kernel,
        out_shape=jax.ShapeDtypeStruct((bs, VPAD), jnp.float32),
    )(tok2d, emb, win, wo, vecs, outw, gvec)


# ----------------------------- parameter init --------------------------------
def _positional_row(seq_len, d_model):
    # pe[0, seq_len-1, :]  (the single row the PyTorch module actually uses)
    pos = float(seq_len - 1)
    div_term = jnp.exp(jnp.arange(0, d_model, 2, dtype=jnp.float32)
                       * (-math.log(10000.0) / d_model))
    pe = jnp.zeros((d_model,), jnp.float32)
    pe = pe.at[0::2].set(jnp.sin(pos * div_term))
    pe = pe.at[1::2].set(jnp.cos(pos * div_term))
    return pe.reshape(1, d_model)


def init_params(key):
    def nxt():
        nonlocal key
        key, sub = jax.random.split(key)
        return sub

    def dense_t(in_f, out_f):
        # Pre-transposed weight (in, out): kernel computes x @ W (no in-kernel .T).
        w = 0.02 * jax.random.normal(nxt(), (in_f, out_f), jnp.float32)
        b = 0.02 * jax.random.normal(nxt(), (1, out_f), jnp.float32)
        return w, b

    emb = 0.1 * jax.random.normal(nxt(), (VOCAB, EMBED), jnp.float32)
    pe_row = _positional_row(SEQ, EMBED)

    layers = []
    for _ in range(N_LAYERS):
        qkv_w, qkv_b = dense_t(EMBED, 3 * EMBED)
        fc_w, fc_b = dense_t(EMBED, EMBED)
        w1, b1 = dense_t(EMBED, FF_HIDDEN)
        w2, b2 = dense_t(EMBED, FF_HIDDEN)
        wo, bo = dense_t(FF_HIDDEN, EMBED)
        w12 = jnp.concatenate([w1, w2], axis=1)    # fused FFN input weight (E, 2*FF)
        b12 = jnp.concatenate([b1, b2], axis=1)    # fused FFN input bias   (1, 2*FF)
        anw = jnp.ones((1, EMBED), jnp.float32)
        ffnw = jnp.ones((1, EMBED), jnp.float32)
        layers.append((anw, qkv_w, qkv_b, pe_row, fc_w, fc_b, ffnw,
                       w12, b12, wo, bo))

    norm_w = jnp.ones((1, EMBED), jnp.float32)
    out_w, out_b = dense_t(EMBED, VOCAB)
    return emb, layers, norm_w, out_w, out_b


def pack_params(params):
    """One-time host-side packing into a handful of HBM slabs (bf16 matmul weights)."""
    emb, layers, norm_w, out_w, out_b = params
    n_layers = len(layers)

    win = jnp.zeros((n_layers, EMBED, WIN_WIDTH), jnp.float32)
    wo_slab = jnp.zeros((n_layers, FF_HIDDEN, EMBED), jnp.float32)
    vecs = jnp.zeros((n_layers, VEC_WIDTH), jnp.float32)
    for l, (anw, qkvw, qkvb, pe, fcw, fcb, ffnw, w12, b12, wo, bo) in enumerate(layers):
        win = win.at[l, :, QKVW_OFF:QKVW_OFF + 3 * EMBED].set(qkvw)
        win = win.at[l, :, FCW_OFF:FCW_OFF + EMBED].set(fcw)
        win = win.at[l, :, W12_OFF:W12_OFF + 2 * FF_HIDDEN].set(w12)
        wo_slab = wo_slab.at[l].set(wo)
        vecs = vecs.at[l, ANW_OFF:ANW_OFF + EMBED].set(anw[0])
        vecs = vecs.at[l, FFNW_OFF:FFNW_OFF + EMBED].set(ffnw[0])
        vecs = vecs.at[l, PE_OFF:PE_OFF + EMBED].set(pe[0])
        vecs = vecs.at[l, QKVB_OFF:QKVB_OFF + 3 * EMBED].set(qkvb[0])
        vecs = vecs.at[l, FCB_OFF:FCB_OFF + EMBED].set(fcb[0])
        vecs = vecs.at[l, B12_OFF:B12_OFF + 2 * FF_HIDDEN].set(b12[0])
        vecs = vecs.at[l, BO_OFF:BO_OFF + EMBED].set(bo[0])

    outw_pad = jnp.zeros((EMBED, VPAD), jnp.float32).at[:, :out_w.shape[1]].set(out_w)
    gvec = jnp.zeros((1, GVEC_WIDTH), jnp.float32)
    gvec = gvec.at[0, GNORM_OFF:GNORM_OFF + EMBED].set(norm_w[0])
    gvec = gvec.at[0, GOUTB_OFF:GOUTB_OFF + out_b.shape[1]].set(out_b[0])

    return (emb.astype(jnp.bfloat16), win.astype(jnp.bfloat16),
            wo_slab.astype(jnp.bfloat16), vecs,
            outw_pad.astype(jnp.bfloat16), gvec)


# ----------------------------- pure-JAX reference ----------------------------
def ref_forward(tokens, params):
    emb, layers, norm_w, out_w, out_b = params

    def rms(x, w):
        return w * (x * jax.lax.rsqrt(jnp.mean(x * x, -1, keepdims=True) + NORM_EPS))

    B, S = tokens.shape
    h = emb[tokens]
    for (anw, qkv_w, qkv_b, pe_row, fc_w, fc_b, ffnw,
         w12, b12, wo, bo) in layers:
        xn = rms(h, anw)
        qkv = xn @ qkv_w + qkv_b
        q, k, v = jnp.split(qkv, 3, axis=-1)
        q, k = q + pe_row, k + pe_row
        q = q.reshape(B, S, NHEADS, HEAD_DIM).transpose(0, 2, 1, 3)
        k = k.reshape(B, S, NHEADS, HEAD_DIM).transpose(0, 2, 1, 3)
        v = v.reshape(B, S, NHEADS, HEAD_DIM).transpose(0, 2, 1, 3)
        s = jnp.einsum('bhqd,bhkd->bhqk', q, k) / math.sqrt(HEAD_DIM)
        p = jax.nn.softmax(s, axis=-1)
        o = jnp.einsum('bhqk,bhkd->bhqd', p, v).transpose(0, 2, 1, 3).reshape(B, S, EMBED)
        h = h + (o @ fc_w + fc_b)
        hn = rms(h, ffnw)
        ab = hn @ w12 + b12
        a, g = ab[..., :FF_HIDDEN], ab[..., FF_HIDDEN:]
        h = h + ((a * jax.nn.sigmoid(a) * g) @ wo + bo)
    return rms(h, norm_w) @ out_w + out_b


# --------------------------------- main --------------------------------------
if __name__ == "__main__":
    key = jax.random.PRNGKey(0)
    k_tok, k_par = jax.random.split(key)
    tokens = jax.random.randint(k_tok, (BATCH, SEQ), 0, VOCAB, dtype=jnp.int32)
    params = init_params(k_par)

    # One-time (not per-call) packing / flattening.
    packed = pack_params(params)
    tok2d = tokens.reshape(BATCH * SEQ, 1).astype(jnp.int32)

    fwd = jax.jit(transformer_forward)
    out = fwd(tok2d, *packed)
    out = jax.block_until_ready(out)

    logits = out[:, :VOCAB].reshape(BATCH, SEQ, VOCAB)
    assert logits.shape == (BATCH, SEQ, VOCAB)
    assert logits.dtype == jnp.float32

    # Reference is full f32; kernel uses bf16 weights/activation casts on the MXU
    # plus an approximate softmax reciprocal -> allow a slightly looser tolerance.
    ref = ref_forward(tokens, params)
    err = float(jnp.max(jnp.abs(logits - ref)))
    assert err < 2e-2, f"kernel/reference mismatch: max abs err {err}"

    print("KERNEL_OK")
</pallas_src>

<mosaic_0001>
module attributes {stable_mosaic.version = 11 : i64} {
  func.func @fused_forward_kernel(%arg0: memref<16x1xi32, #tpu.memory_space<vmem>>, %arg1: memref<64x32xbf16, #tpu.memory_space<vmem>>, %arg2: memref<2x32x768xbf16, #tpu.memory_space<vmem>>, %arg3: memref<2x256x32xbf16, #tpu.memory_space<vmem>>, %arg4: memref<2x1280xf32, #tpu.memory_space<vmem>>, %arg5: memref<32x128xbf16, #tpu.memory_space<vmem>>, %arg6: memref<1x256xf32, #tpu.memory_space<vmem>>, %arg7: memref<16x128xf32, #tpu.memory_space<vmem>>) attributes {dimension_semantics = [], scalar_prefetch = 0 : i64, scratch_operands = 0 : i64, tpu.core_type = #tpu.core_type<tc>} {
    %c0 = arith.constant 0 : index
    %c0_0 = arith.constant 0 : index
    %0 = vector.load %arg0[%c0, %c0_0] : memref<16x1xi32, #tpu.memory_space<vmem>>, vector<16x1xi32>
    %1 = tpu.iota {dimensions = array<i32: 1>} : vector<16x64xi32>
    %2 = vector.broadcast %0 : vector<16x1xi32> to vector<16x64xi32>
    %3 = arith.cmpi eq, %1, %2 : vector<16x64xi32>
    %4 = arith.extui %3 : vector<16x64xi1> to vector<16x64xi32>
    %5 = arith.sitofp %4 : vector<16x64xi32> to vector<16x64xf32>
    %6 = arith.truncf %5 : vector<16x64xf32> to vector<16x64xbf16>
    %c0_1 = arith.constant 0 : index
    %c0_2 = arith.constant 0 : index
    %7 = vector.load %arg1[%c0_1, %c0_2] : memref<64x32xbf16, #tpu.memory_space<vmem>>, vector<64x32xbf16>
    %cst = arith.constant dense<0.000000e+00> : vector<16x32xf32>
    %8 = tpu.matmul %6, %7, %cst {dimension_numbers = #tpu.dot_dimension_numbers<[1], [0], [0], [1], [0, 0, 1, 1], [], []>} : vector<16x64xbf16>, vector<64x32xbf16>, vector<16x32xf32> -> vector<16x32xf32>
    %c0_3 = arith.constant 0 : index
    %c0_4 = arith.constant 0 : index
    %c0_5 = arith.constant 0 : index
    %9 = vector.load %arg2[%c0_3, %c0_4, %c0_5] : memref<2x32x768xbf16, #tpu.memory_space<vmem>>, vector<1x32x96xbf16>
    %10 = vector.shape_cast %9 : vector<1x32x96xbf16> to vector<32x96xbf16>
    %c0_6 = arith.constant 0 : index
    %c0_7 = arith.constant 0 : index
    %c128 = arith.constant 128 : index
    %11 = vector.load %arg2[%c0_6, %c0_7, %c128] : memref<2x32x768xbf16, #tpu.memory_space<vmem>>, vector<1x32x32xbf16>
    %12 = vector.shape_cast %11 : vector<1x32x32xbf16> to vector<32x32xbf16>
    %c0_8 = arith.constant 0 : index
    %c0_9 = arith.constant 0 : index
    %c256 = arith.constant 256 : index
    %13 = vector.load %arg2[%c0_8, %c0_9, %c256] : memref<2x32x768xbf16, #tpu.memory_space<vmem>>, vector<1x32x512xbf16>
    %14 = vector.shape_cast %13 : vector<1x32x512xbf16> to vector<32x512xbf16>
    %c0_10 = arith.constant 0 : index
    %c0_11 = arith.constant 0 : index
    %c0_12 = arith.constant 0 : index
    %15 = vector.load %arg3[%c0_10, %c0_11, %c0_12] : memref<2x256x32xbf16, #tpu.memory_space<vmem>>, vector<1x256x32xbf16>
    %16 = vector.shape_cast %15 : vector<1x256x32xbf16> to vector<256x32xbf16>
    %c0_13 = arith.constant 0 : index
    %c0_14 = arith.constant 0 : index
    %17 = vector.load %arg4[%c0_13, %c0_14] : memref<2x1280xf32, #tpu.memory_space<vmem>>, vector<1x32xf32>
    %c0_15 = arith.constant 0 : index
    %c128_16 = arith.constant 128 : index
    %18 = vector.load %arg4[%c0_15, %c128_16] : memref<2x1280xf32, #tpu.memory_space<vmem>>, vector<1x32xf32>
    %c0_17 = arith.constant 0 : index
    %c256_18 = arith.constant 256 : index
    %19 = vector.load %arg4[%c0_17, %c256_18] : memref<2x1280xf32, #tpu.memory_space<vmem>>, vector<1x32xf32>
    %c0_19 = arith.constant 0 : index
    %c384 = arith.constant 384 : index
    %20 = vector.load %arg4[%c0_19, %c384] : memref<2x1280xf32, #tpu.memory_space<vmem>>, vector<1x96xf32>
    %c0_20 = arith.constant 0 : index
    %c512 = arith.constant 512 : index
    %21 = vector.load %arg4[%c0_20, %c512] : memref<2x1280xf32, #tpu.memory_space<vmem>>, vector<1x32xf32>
    %c0_21 = arith.constant 0 : index
    %c640 = arith.constant 640 : index
    %22 = vector.load %arg4[%c0_21, %c640] : memref<2x1280xf32, #tpu.memory_space<vmem>>, vector<1x512xf32>
    %c0_22 = arith.constant 0 : index
    %c1152 = arith.constant 1152 : index
    %23 = vector.load %arg4[%c0_22, %c1152] : memref<2x1280xf32, #tpu.memory_space<vmem>>, vector<1x32xf32>
    %24 = arith.mulf %8, %8 : vector<16x32xf32>
    %cst_23 = arith.constant dense<0.000000e+00> : vector<16xf32>
    %25 = vector.multi_reduction <add>, %24, %cst_23 [1] : vector<16x32xf32> to vector<16xf32>
    %26 = vector.shape_cast %25 : vector<16xf32> to vector<16x1xf32>
    %cst_24 = arith.constant 3.200000e+01 : f32
    %27 = vector.broadcast %cst_24 : f32 to vector<16x1xf32>
    %28 = arith.divf %26, %27 : vector<16x1xf32>
    %cst_25 = arith.constant 9.99999997E-7 : f32
    %29 = vector.broadcast %cst_25 : f32 to vector<16x1xf32>
    %30 = arith.addf %28, %29 : vector<16x1xf32>
    %31 = math.rsqrt %30 : vector<16x1xf32>
    %32 = vector.broadcast %31 : vector<16x1xf32> to vector<16x32xf32>
    %33 = arith.mulf %8, %32 : vector<16x32xf32>
    %34 = vector.broadcast %17 : vector<1x32xf32> to vector<16x32xf32>
    %35 = arith.mulf %34, %33 : vector<16x32xf32>
    %36 = arith.truncf %35 : vector<16x32xf32> to vector<16x32xbf16>
    %cst_26 = arith.constant dense<0.000000e+00> : vector<16x96xf32>
    %37 = tpu.matmul %36, %10, %cst_26 {dimension_numbers = #tpu.dot_dimension_numbers<[1], [0], [0], [1], [0, 0, 1, 1], [], []>} : vector<16x32xbf16>, vector<32x96xbf16>, vector<16x96xf32> -> vector<16x96xf32>
    %38 = vector.broadcast %20 : vector<1x96xf32> to vector<16x96xf32>
    %39 = arith.addf %37, %38 : vector<16x96xf32>
    %40 = vector.extract_strided_slice %39 {offsets = [0, 0], sizes = [16, 32], strides = [1, 1]} : vector<16x96xf32> to vector<16x32xf32>
    %41 = vector.broadcast %19 : vector<1x32xf32> to vector<16x32xf32>
    %42 = arith.addf %40, %41 : vector<16x32xf32>
    %cst_27 = arith.constant 0.353553385 : f32
    %43 = vector.broadcast %cst_27 : f32 to vector<16x32xf32>
    %44 = arith.mulf %42, %43 : vector<16x32xf32>
    %45 = vector.extract_strided_slice %39 {offsets = [0, 32], sizes = [16, 32], strides = [1, 1]} : vector<16x96xf32> to vector<16x32xf32>
    %46 = vector.broadcast %19 : vector<1x32xf32> to vector<16x32xf32>
    %47 = arith.addf %45, %46 : vector<16x32xf32>
    %48 = vector.extract_strided_slice %39 {offsets = [0, 64], sizes = [16, 32], strides = [1, 1]} : vector<16x96xf32> to vector<16x32xf32>
    %49 = vector.shape_cast %44 : vector<16x32xf32> to vector<2x8x32xf32>
    %50 = vector.shape_cast %47 : vector<16x32xf32> to vector<2x8x32xf32>
    %51 = vector.shape_cast %48 : vector<16x32xf32> to vector<2x8x32xf32>
    %52 = vector.extract_strided_slice %49 {offsets = [0, 0, 0], sizes = [2, 8, 8], strides = [1, 1, 1]} : vector<2x8x32xf32> to vector<2x8x8xf32>
    %53 = vector.extract_strided_slice %50 {offsets = [0, 0, 0], sizes = [2, 8, 8], strides = [1, 1, 1]} : vector<2x8x32xf32> to vector<2x8x8xf32>
    %54 = vector.extract_strided_slice %51 {offsets = [0, 0, 0], sizes = [2, 8, 8], strides = [1, 1, 1]} : vector<2x8x32xf32> to vector<2x8x8xf32>
    "tpu.trace_start"() <{level = 10 : i32, message = "bqd,bkd->bqk"}> : () -> ()
    %cst_28 = arith.constant dense<0.000000e+00> : vector<2x8x8xf32>
    %55 = tpu.matmul %52, %53, %cst_28 {dimension_numbers = #tpu.dot_dimension_numbers<[2], [2], [1], [1], [0, 0, 0, 1, 1, 1], [0], [0]>} : vector<2x8x8xf32>, vector<2x8x8xf32>, vector<2x8x8xf32> -> vector<2x8x8xf32>
    "tpu.trace_stop"() : () -> ()
    %cst_29 = arith.constant dense<0xFF800000> : vector<2x8xf32>
    %56 = vector.multi_reduction <maximumf>, %55, %cst_29 [2] : vector<2x8x8xf32> to vector<2x8xf32>
    %57 = vector.shape_cast %56 : vector<2x8xf32> to vector<2x8x1xf32>
    %58 = vector.broadcast %57 : vector<2x8x1xf32> to vector<2x8x8xf32>
    %59 = arith.subf %55, %58 : vector<2x8x8xf32>
    %60 = math.exp %59 : vector<2x8x8xf32>
    %cst_30 = arith.constant dense<0.000000e+00> : vector<2x8xf32>
    %61 = vector.multi_reduction <add>, %60, %cst_30 [2] : vector<2x8x8xf32> to vector<2x8xf32>
    %62 = vector.shape_cast %61 : vector<2x8xf32> to vector<2x8x1xf32>
    %63 = tpu.reciprocal %62 {approx = true} : vector<2x8x1xf32> -> vector<2x8x1xf32>
    %64 = vector.broadcast %63 : vector<2x8x1xf32> to vector<2x8x8xf32>
    %65 = arith.mulf %60, %64 : vector<2x8x8xf32>
    "tpu.trace_start"() <{level = 10 : i32, message = "bqk,bkd->bqd"}> : () -> ()
    %cst_31 = arith.constant dense<0.000000e+00> : vector<2x8x8xf32>
    %66 = tpu.matmul %65, %54, %cst_31 {dimension_numbers = #tpu.dot_dimension_numbers<[2], [1], [1], [2], [0, 0, 0, 1, 1, 2], [0], [0]>} : vector<2x8x8xf32>, vector<2x8x8xf32>, vector<2x8x8xf32> -> vector<2x8x8xf32>
    "tpu.trace_stop"() : () -> ()
    %67 = vector.extract_strided_slice %49 {offsets = [0, 0, 8], sizes = [2, 8, 8], strides = [1, 1, 1]} : vector<2x8x32xf32> to vector<2x8x8xf32>
    %68 = vector.extract_strided_slice %50 {offsets = [0, 0, 8], sizes = [2, 8, 8], strides = [1, 1, 1]} : vector<2x8x32xf32> to vector<2x8x8xf32>
    %69 = vector.extract_strided_slice %51 {offsets = [0, 0, 8], sizes = [2, 8, 8], strides = [1, 1, 1]} : vector<2x8x32xf32> to vector<2x8x8xf32>
    "tpu.trace_start"() <{level = 10 : i32, message = "bqd,bkd->bqk"}> : () -> ()
    %cst_32 = arith.constant dense<0.000000e+00> : vector<2x8x8xf32>
    %70 = tpu.matmul %67, %68, %cst_32 {dimension_numbers = #tpu.dot_dimension_numbers<[2], [2], [1], [1], [0, 0, 0, 1, 1, 1], [0], [0]>} : vector<2x8x8xf32>, vector<2x8x8xf32>, vector<2x8x8xf32> -> vector<2x8x8xf32>
    "tpu.trace_stop"() : () -> ()
    %cst_33 = arith.constant dense<0xFF800000> : vector<2x8xf32>
    %71 = vector.multi_reduction <maximumf>, %70, %cst_33 [2] : vector<2x8x8xf32> to vector<2x8xf32>
    %72 = vector.shape_cast %71 : vector<2x8xf32> to vector<2x8x1xf32>
    %73 = vector.broadcast %72 : vector<2x8x1xf32> to vector<2x8x8xf32>
    %74 = arith.subf %70, %73 : vector<2x8x8xf32>
    %75 = math.exp %74 : vector<2x8x8xf32>
    %cst_34 = arith.constant dense<0.000000e+00> : vector<2x8xf32>
    %76 = vector.multi_reduction <add>, %75, %cst_34 [2] : vector<2x8x8xf32> to vector<2x8xf32>
    %77 = vector.shape_cast %76 : vector<2x8xf32> to vector<2x8x1xf32>
    %78 = tpu.reciprocal %77 {approx = true} : vector<2x8x1xf32> -> vector<2x8x1xf32>
    %79 = vector.broadcast %78 : vector<2x8x1xf32> to vector<2x8x8xf32>
    %80 = arith.mulf %75, %79 : vector<2x8x8xf32>
    "tpu.trace_start"() <{level = 10 : i32, message = "bqk,bkd->bqd"}> : () -> ()
    %cst_35 = arith.constant dense<0.000000e+00> : vector<2x8x8xf32>
    %81 = tpu.matmul %80, %69, %cst_35 {dimension_numbers = #tpu.dot_dimension_numbers<[2], [1], [1], [2], [0, 0, 0, 1, 1, 2], [0], [0]>} : vector<2x8x8xf32>, vector<2x8x8xf32>, vector<2x8x8xf32> -> vector<2x8x8xf32>
    "tpu.trace_stop"() : () -> ()
    %82 = vector.extract_strided_slice %49 {offsets = [0, 0, 16], sizes = [2, 8, 8], strides = [1, 1, 1]} : vector<2x8x32xf32> to vector<2x8x8xf32>
    %83 = vector.extract_strided_slice %50 {offsets = [0, 0, 16], sizes = [2, 8, 8], strides = [1, 1, 1]} : vector<2x8x32xf32> to vector<2x8x8xf32>
    %84 = vector.extract_strided_slice %51 {offsets = [0, 0, 16], sizes = [2, 8, 8], strides = [1, 1, 1]} : vector<2x8x32xf32> to vector<2x8x8xf32>
    "tpu.trace_start"() <{level = 10 : i32, message = "bqd,bkd->bqk"}> : () -> ()
    %cst_36 = arith.constant dense<0.000000e+00> : vector<2x8x8xf32>
    %85 = tpu.matmul %82, %83, %cst_36 {dimension_numbers = #tpu.dot_dimension_numbers<[2], [2], [1], [1], [0, 0, 0, 1, 1, 1], [0], [0]>} : vector<2x8x8xf32>, vector<2x8x8xf32>, vector<2x8x8xf32> -> vector<2x8x8xf32>
    "tpu.trace_stop"() : () -> ()
    %cst_37 = arith.constant dense<0xFF800000> : vector<2x8xf32>
    %86 = vector.multi_reduction <maximumf>, %85, %cst_37 [2] : vector<2x8x8xf32> to vector<2x8xf32>
    %87 = vector.shape_cast %86 : vector<2x8xf32> to vector<2x8x1xf32>
    %88 = vector.broadcast %87 : vector<2x8x1xf32> to vector<2x8x8xf32>
    %89 = arith.subf %85, %88 : vector<2x8x8xf32>
    %90 = math.exp %89 : vector<2x8x8xf32>
    %cst_38 = arith.constant dense<0.000000e+00> : vector<2x8xf32>
    %91 = vector.multi_reduction <add>, %90, %cst_38 [2] : vector<2x8x8xf32> to vector<2x8xf32>
    %92 = vector.shape_cast %91 : vector<2x8xf32> to vector<2x8x1xf32>
    %93 = tpu.reciprocal %92 {approx = true} : vector<2x8x1xf32> -> vector<2x8x1xf32>
    %94 = vector.broadcast %93 : vector<2x8x1xf32> to vector<2x8x8xf32>
    %95 = arith.mulf %90, %94 : vector<2x8x8xf32>
    "tpu.trace_start"() <{level = 10 : i32, message = "bqk,bkd->bqd"}> : () -> ()
    %cst_39 = arith.constant dense<0.000000e+00> : vector<2x8x8xf32>
    %96 = tpu.matmul %95, %84, %cst_39 {dimension_numbers = #tpu.dot_dimension_numbers<[2], [1], [1], [2], [0, 0, 0, 1, 1, 2], [0], [0]>} : vector<2x8x8xf32>, vector<2x8x8xf32>, vector<2x8x8xf32> -> vector<2x8x8xf32>
    "tpu.trace_stop"() : () -> ()
    %97 = vector.extract_strided_slice %49 {offsets = [0, 0, 24], sizes = [2, 8, 8], strides = [1, 1, 1]} : vector<2x8x32xf32> to vector<2x8x8xf32>
    %98 = vector.extract_strided_slice %50 {offsets = [0, 0, 24], sizes = [2, 8, 8], strides = [1, 1, 1]} : vector<2x8x32xf32> to vector<2x8x8xf32>
    %99 = vector.extract_strided_slice %51 {offsets = [0, 0, 24], sizes = [2, 8, 8], strides = [1, 1, 1]} : vector<2x8x32xf32> to vector<2x8x8xf32>
    "tpu.trace_start"() <{level = 10 : i32, message = "bqd,bkd->bqk"}> : () -> ()
    %cst_40 = arith.constant dense<0.000000e+00> : vector<2x8x8xf32>
    %100 = tpu.matmul %97, %98, %cst_40 {dimension_numbers = #tpu.dot_dimension_numbers<[2], [2], [1], [1], [0, 0, 0, 1, 1, 1], [0], [0]>} : vector<2x8x8xf32>, vector<2x8x8xf32>, vector<2x8x8xf32> -> vector<2x8x8xf32>
    "tpu.trace_stop"() : () -> ()
    %cst_41 = arith.constant dense<0xFF800000> : vector<2x8xf32>
    %101 = vector.multi_reduction <maximumf>, %100, %cst_41 [2] : vector<2x8x8xf32> to vector<2x8xf32>
    %102 = vector.shape_cast %101 : vector<2x8xf32> to vector<2x8x1xf32>
    %103 = vector.broadcast %102 : vector<2x8x1xf32> to vector<2x8x8xf32>
    %104 = arith.subf %100, %103 : vector<2x8x8xf32>
    %105 = math.exp %104 : vector<2x8x8xf32>
    %cst_42 = arith.constant dense<0.000000e+00> : vector<2x8xf32>
    %106 = vector.multi_reduction <add>, %105, %cst_42 [2] : vector<2x8x8xf32> to vector<2x8xf32>
    %107 = vector.shape_cast %106 : vector<2x8xf32> to vector<2x8x1xf32>
    %108 = tpu.reciprocal %107 {approx = true} : vector<2x8x1xf32> -> vector<2x8x1xf32>
    %109 = vector.broadcast %108 : vector<2x8x1xf32> to vector<2x8x8xf32>
    %110 = arith.mulf %105, %109 : vector<2x8x8xf32>
    "tpu.trace_start"() <{level = 10 : i32, message = "bqk,bkd->bqd"}> : () -> ()
    %cst_43 = arith.constant dense<0.000000e+00> : vector<2x8x8xf32>
    %111 = tpu.matmul %110, %99, %cst_43 {dimension_numbers = #tpu.dot_dimension_numbers<[2], [1], [1], [2], [0, 0, 0, 1, 1, 2], [0], [0]>} : vector<2x8x8xf32>, vector<2x8x8xf32>, vector<2x8x8xf32> -> vector<2x8x8xf32>
    "tpu.trace_stop"() : () -> ()
    %112 = tpu.concatenate %66, %81, %96, %111 in 2 : vector<2x8x8xf32>, vector<2x8x8xf32>, vector<2x8x8xf32>, vector<2x8x8xf32> -> vector<2x8x32xf32>
    %113 = vector.shape_cast %112 : vector<2x8x32xf32> to vector<16x32xf32>
    %114 = arith.truncf %113 : vector<16x32xf32> to vector<16x32xbf16>
    %cst_44 = arith.constant dense<0.000000e+00> : vector<16x32xf32>
    %115 = tpu.matmul %114, %12, %cst_44 {dimension_numbers = #tpu.dot_dimension_numbers<[1], [0], [0], [1], [0, 0, 1, 1], [], []>} : vector<16x32xbf16>, vector<32x32xbf16>, vector<16x32xf32> -> vector<16x32xf32>
    %116 = vector.broadcast %21 : vector<1x32xf32> to vector<16x32xf32>
    %117 = arith.addf %115, %116 : vector<16x32xf32>
    %118 = arith.addf %8, %117 : vector<16x32xf32>
    %119 = arith.mulf %118, %118 : vector<16x32xf32>
    %cst_45 = arith.constant dense<0.000000e+00> : vector<16xf32>
    %120 = vector.multi_reduction <add>, %119, %cst_45 [1] : vector<16x32xf32> to vector<16xf32>
    %121 = vector.shape_cast %120 : vector<16xf32> to vector<16x1xf32>
    %cst_46 = arith.constant 3.200000e+01 : f32
    %122 = vector.broadcast %cst_46 : f32 to vector<16x1xf32>
    %123 = arith.divf %121, %122 : vector<16x1xf32>
    %cst_47 = arith.constant 9.99999997E-7 : f32
    %124 = vector.broadcast %cst_47 : f32 to vector<16x1xf32>
    %125 = arith.addf %123, %124 : vector<16x1xf32>
    %126 = math.rsqrt %125 : vector<16x1xf32>
    %127 = vector.broadcast %126 : vector<16x1xf32> to vector<16x32xf32>
    %128 = arith.mulf %118, %127 : vector<16x32xf32>
    %129 = vector.broadcast %18 : vector<1x32xf32> to vector<16x32xf32>
    %130 = arith.mulf %129, %128 : vector<16x32xf32>
    %131 = arith.truncf %130 : vector<16x32xf32> to vector<16x32xbf16>
    %cst_48 = arith.constant dense<0.000000e+00> : vector<16x512xf32>
    %132 = tpu.matmul %131, %14, %cst_48 {dimension_numbers = #tpu.dot_dimension_numbers<[1], [0], [0], [1], [0, 0, 1, 1], [], []>} : vector<16x32xbf16>, vector<32x512xbf16>, vector<16x512xf32> -> vector<16x512xf32>
    %133 = vector.broadcast %22 : vector<1x512xf32> to vector<16x512xf32>
    %134 = arith.addf %132, %133 : vector<16x512xf32>
    %135 = vector.extract_strided_slice %134 {offsets = [0, 0], sizes = [16, 256], strides = [1, 1]} : vector<16x512xf32> to vector<16x256xf32>
    %136 = vector.extract_strided_slice %134 {offsets = [0, 256], sizes = [16, 256], strides = [1, 1]} : vector<16x512xf32> to vector<16x256xf32>
    %137 = arith.negf %135 : vector<16x256xf32>
    %138 = math.exp %137 : vector<16x256xf32>
    %cst_49 = arith.constant 1.000000e+00 : f32
    %139 = vector.broadcast %cst_49 : f32 to vector<16x256xf32>
    %140 = arith.addf %139, %138 : vector<16x256xf32>
    %141 = arith.divf %139, %140 : vector<16x256xf32>
    %142 = arith.mulf %135, %141 : vector<16x256xf32>
    %143 = arith.mulf %142, %136 : vector<16x256xf32>
    %144 = arith.truncf %143 : vector<16x256xf32> to vector<16x256xbf16>
    %cst_50 = arith.constant dense<0.000000e+00> : vector<16x32xf32>
    %145 = tpu.matmul %144, %16, %cst_50 {dimension_numbers = #tpu.dot_dimension_numbers<[1], [0], [0], [1], [0, 0, 1, 1], [], []>} : vector<16x256xbf16>, vector<256x32xbf16>, vector<16x32xf32> -> vector<16x32xf32>
    %146 = arith.addf %118, %145 : vector<16x32xf32>
    %147 = vector.broadcast %23 : vector<1x32xf32> to vector<16x32xf32>
    %148 = arith.addf %146, %147 : vector<16x32xf32>
    %c1 = arith.constant 1 : index
    %c0_51 = arith.constant 0 : index
    %c0_52 = arith.constant 0 : index
    %149 = vector.load %arg2[%c1, %c0_51, %c0_52] : memref<2x32x768xbf16, #tpu.memory_space<vmem>>, vector<1x32x96xbf16>
    %150 = vector.shape_cast %149 : vector<1x32x96xbf16> to vector<32x96xbf16>
    %c1_53 = arith.constant 1 : index
    %c0_54 = arith.constant 0 : index
    %c128_55 = arith.constant 128 : index
    %151 = vector.load %arg2[%c1_53, %c0_54, %c128_55] : memref<2x32x768xbf16, #tpu.memory_space<vmem>>, vector<1x32x32xbf16>
    %152 = vector.shape_cast %151 : vector<1x32x32xbf16> to vector<32x32xbf16>
    %c1_56 = arith.constant 1 : index
    %c0_57 = arith.constant 0 : index
    %c256_58 = arith.constant 256 : index
    %153 = vector.load %arg2[%c1_56, %c0_57, %c256_58] : memref<2x32x768xbf16, #tpu.memory_space<vmem>>, vector<1x32x512xbf16>
    %154 = vector.shape_cast %153 : vector<1x32x512xbf16> to vector<32x512xbf16>
    %c1_59 = arith.constant 1 : index
    %c0_60 = arith.constant 0 : index
    %c0_61 = arith.constant 0 : index
    %155 = vector.load %arg3[%c1_59, %c0_60, %c0_61] : memref<2x256x32xbf16, #tpu.memory_space<vmem>>, vector<1x256x32xbf16>
    %156 = vector.shape_cast %155 : vector<1x256x32xbf16> to vector<256x32xbf16>
    %c1_62 = arith.constant 1 : index
    %c0_63 = arith.constant 0 : index
    %157 = vector.load %arg4[%c1_62, %c0_63] : memref<2x1280xf32, #tpu.memory_space<vmem>>, vector<1x32xf32>
    %c1_64 = arith.constant 1 : index
    %c128_65 = arith.constant 128 : index
    %158 = vector.load %arg4[%c1_64, %c128_65] : memref<2x1280xf32, #tpu.memory_space<vmem>>, vector<1x32xf32>
    %c1_66 = arith.constant 1 : index
    %c256_67 = arith.constant 256 : index
    %159 = vector.load %arg4[%c1_66, %c256_67] : memref<2x1280xf32, #tpu.memory_space<vmem>>, vector<1x32xf32>
    %c1_68 = arith.constant 1 : index
    %c384_69 = arith.constant 384 : index
    %160 = vector.load %arg4[%c1_68, %c384_69] : memref<2x1280xf32, #tpu.memory_space<vmem>>, vector<1x96xf32>
    %c1_70 = arith.constant 1 : index
    %c512_71 = arith.constant 512 : index
    %161 = vector.load %arg4[%c1_70, %c512_71] : memref<2x1280xf32, #tpu.memory_space<vmem>>, vector<1x32xf32>
    %c1_72 = arith.constant 1 : index
    %c640_73 = arith.constant 640 : index
    %162 = vector.load %arg4[%c1_72, %c640_73] : memref<2x1280xf32, #tpu.memory_space<vmem>>, vector<1x512xf32>
    %c1_74 = arith.constant 1 : index
    %c1152_75 = arith.constant 1152 : index
    %163 = vector.load %arg4[%c1_74, %c1152_75] : memref<2x1280xf32, #tpu.memory_space<vmem>>, vector<1x32xf32>
    %164 = arith.mulf %148, %148 : vector<16x32xf32>
    %cst_76 = arith.constant dense<0.000000e+00> : vector<16xf32>
    %165 = vector.multi_reduction <add>, %164, %cst_76 [1] : vector<16x32xf32> to vector<16xf32>
    %166 = vector.shape_cast %165 : vector<16xf32> to vector<16x1xf32>
    %cst_77 = arith.constant 3.200000e+01 : f32
    %167 = vector.broadcast %cst_77 : f32 to vector<16x1xf32>
    %168 = arith.divf %166, %167 : vector<16x1xf32>
    %cst_78 = arith.constant 9.99999997E-7 : f32
    %169 = vector.broadcast %cst_78 : f32 to vector<16x1xf32>
    %170 = arith.addf %168, %169 : vector<16x1xf32>
    %171 = math.rsqrt %170 : vector<16x1xf32>
    %172 = vector.broadcast %171 : vector<16x1xf32> to vector<16x32xf32>
    %173 = arith.mulf %148, %172 : vector<16x32xf32>
    %174 = vector.broadcast %157 : vector<1x32xf32> to vector<16x32xf32>
    %175 = arith.mulf %174, %173 : vector<16x32xf32>
    %176 = arith.truncf %175 : vector<16x32xf32> to vector<16x32xbf16>
    %cst_79 = arith.constant dense<0.000000e+00> : vector<16x96xf32>
    %177 = tpu.matmul %176, %150, %cst_79 {dimension_numbers = #tpu.dot_dimension_numbers<[1], [0], [0], [1], [0, 0, 1, 1], [], []>} : vector<16x32xbf16>, vector<32x96xbf16>, vector<16x96xf32> -> vector<16x96xf32>
    %178 = vector.broadcast %160 : vector<1x96xf32> to vector<16x96xf32>
    %179 = arith.addf %177, %178 : vector<16x96xf32>
    %180 = vector.extract_strided_slice %179 {offsets = [0, 0], sizes = [16, 32], strides = [1, 1]} : vector<16x96xf32> to vector<16x32xf32>
    %181 = vector.broadcast %159 : vector<1x32xf32> to vector<16x32xf32>
    %182 = arith.addf %180, %181 : vector<16x32xf32>
    %cst_80 = arith.constant 0.353553385 : f32
    %183 = vector.broadcast %cst_80 : f32 to vector<16x32xf32>
    %184 = arith.mulf %182, %183 : vector<16x32xf32>
    %185 = vector.extract_strided_slice %179 {offsets = [0, 32], sizes = [16, 32], strides = [1, 1]} : vector<16x96xf32> to vector<16x32xf32>
    %186 = vector.broadcast %159 : vector<1x32xf32> to vector<16x32xf32>
    %187 = arith.addf %185, %186 : vector<16x32xf32>
    %188 = vector.extract_strided_slice %179 {offsets = [0, 64], sizes = [16, 32], strides = [1, 1]} : vector<16x96xf32> to vector<16x32xf32>
    %189 = vector.shape_cast %184 : vector<16x32xf32> to vector<2x8x32xf32>
    %190 = vector.shape_cast %187 : vector<16x32xf32> to vector<2x8x32xf32>
    %191 = vector.shape_cast %188 : vector<16x32xf32> to vector<2x8x32xf32>
    %192 = vector.extract_strided_slice %189 {offsets = [0, 0, 0], sizes = [2, 8, 8], strides = [1, 1, 1]} : vector<2x8x32xf32> to vector<2x8x8xf32>
    %193 = vector.extract_strided_slice %190 {offsets = [0, 0, 0], sizes = [2, 8, 8], strides = [1, 1, 1]} : vector<2x8x32xf32> to vector<2x8x8xf32>
    %194 = vector.extract_strided_slice %191 {offsets = [0, 0, 0], sizes = [2, 8, 8], strides = [1, 1, 1]} : vector<2x8x32xf32> to vector<2x8x8xf32>
    "tpu.trace_start"() <{level = 10 : i32, message = "bqd,bkd->bqk"}> : () -> ()
    %cst_81 = arith.constant dense<0.000000e+00> : vector<2x8x8xf32>
    %195 = tpu.matmul %192, %193, %cst_81 {dimension_numbers = #tpu.dot_dimension_numbers<[2], [2], [1], [1], [0, 0, 0, 1, 1, 1], [0], [0]>} : vector<2x8x8xf32>, vector<2x8x8xf32>, vector<2x8x8xf32> -> vector<2x8x8xf32>
    "tpu.trace_stop"() : () -> ()
    %cst_82 = arith.constant dense<0xFF800000> : vector<2x8xf32>
    %196 = vector.multi_reduction <maximumf>, %195, %cst_82 [2] : vector<2x8x8xf32> to vector<2x8xf32>
    %197 = vector.shape_cast %196 : vector<2x8xf32> to vector<2x8x1xf32>
    %198 = vector.broadcast %197 : vector<2x8x1xf32> to vector<2x8x8xf32>
    %199 = arith.subf %195, %198 : vector<2x8x8xf32>
    %200 = math.exp %199 : vector<2x8x8xf32>
    %cst_83 = arith.constant dense<0.000000e+00> : vector<2x8xf32>
    %201 = vector.multi_reduction <add>, %200, %cst_83 [2] : vector<2x8x8xf32> to vector<2x8xf32>
    %202 = vector.shape_cast %201 : vector<2x8xf32> to vector<2x8x1xf32>
    %203 = tpu.reciprocal %202 {approx = true} : vector<2x8x1xf32> -> vector<2x8x1xf32>
    %204 = vector.broadcast %203 : vector<2x8x1xf32> to vector<2x8x8xf32>
    %205 = arith.mulf %200, %204 : vector<2x8x8xf32>
    "tpu.trace_start"() <{level = 10 : i32, message = "bqk,bkd->bqd"}> : () -> ()
    %cst_84 = arith.constant dense<0.000000e+00> : vector<2x8x8xf32>
    %206 = tpu.matmul %205, %194, %cst_84 {dimension_numbers = #tpu.dot_dimension_numbers<[2], [1], [1], [2], [0, 0, 0, 1, 1, 2], [0], [0]>} : vector<2x8x8xf32>, vector<2x8x8xf32>, vector<2x8x8xf32> -> vector<2x8x8xf32>
    "tpu.trace_stop"() : () -> ()
    %207 = vector.extract_strided_slice %189 {offsets = [0, 0, 8], sizes = [2, 8, 8], strides = [1, 1, 1]} : vector<2x8x32xf32> to vector<2x8x8xf32>
    %208 = vector.extract_strided_slice %190 {offsets = [0, 0, 8], sizes = [2, 8, 8], strides = [1, 1, 1]} : vector<2x8x32xf32> to vector<2x8x8xf32>
    %209 = vector.extract_strided_slice %191 {offsets = [0, 0, 8], sizes = [2, 8, 8], strides = [1, 1, 1]} : vector<2x8x32xf32> to vector<2x8x8xf32>
    "tpu.trace_start"() <{level = 10 : i32, message = "bqd,bkd->bqk"}> : () -> ()
    %cst_85 = arith.constant dense<0.000000e+00> : vector<2x8x8xf32>
    %210 = tpu.matmul %207, %208, %cst_85 {dimension_numbers = #tpu.dot_dimension_numbers<[2], [2], [1], [1], [0, 0, 0, 1, 1, 1], [0], [0]>} : vector<2x8x8xf32>, vector<2x8x8xf32>, vector<2x8x8xf32> -> vector<2x8x8xf32>
    "tpu.trace_stop"() : () -> ()
    %cst_86 = arith.constant dense<0xFF800000> : vector<2x8xf32>
    %211 = vector.multi_reduction <maximumf>, %210, %cst_86 [2] : vector<2x8x8xf32> to vector<2x8xf32>
    %212 = vector.shape_cast %211 : vector<2x8xf32> to vector<2x8x1xf32>
    %213 = vector.broadcast %212 : vector<2x8x1xf32> to vector<2x8x8xf32>
    %214 = arith.subf %210, %213 : vector<2x8x8xf32>
    %215 = math.exp %214 : vector<2x8x8xf32>
    %cst_87 = arith.constant dense<0.000000e+00> : vector<2x8xf32>
    %216 = vector.multi_reduction <add>, %215, %cst_87 [2] : vector<2x8x8xf32> to vector<2x8xf32>
    %217 = vector.shape_cast %216 : vector<2x8xf32> to vector<2x8x1xf32>
    %218 = tpu.reciprocal %217 {approx = true} : vector<2x8x1xf32> -> vector<2x8x1xf32>
    %219 = vector.broadcast %218 : vector<2x8x1xf32> to vector<2x8x8xf32>
    %220 = arith.mulf %215, %219 : vector<2x8x8xf32>
    "tpu.trace_start"() <{level = 10 : i32, message = "bqk,bkd->bqd"}> : () -> ()
    %cst_88 = arith.constant dense<0.000000e+00> : vector<2x8x8xf32>
    %221 = tpu.matmul %220, %209, %cst_88 {dimension_numbers = #tpu.dot_dimension_numbers<[2], [1], [1], [2], [0, 0, 0, 1, 1, 2], [0], [0]>} : vector<2x8x8xf32>, vector<2x8x8xf32>, vector<2x8x8xf32> -> vector<2x8x8xf32>
    "tpu.trace_stop"() : () -> ()
    %222 = vector.extract_strided_slice %189 {offsets = [0, 0, 16], sizes = [2, 8, 8], strides = [1, 1, 1]} : vector<2x8x32xf32> to vector<2x8x8xf32>
    %223 = vector.extract_strided_slice %190 {offsets = [0, 0, 16], sizes = [2, 8, 8], strides = [1, 1, 1]} : vector<2x8x32xf32> to vector<2x8x8xf32>
    %224 = vector.extract_strided_slice %191 {offsets = [0, 0, 16], sizes = [2, 8, 8], strides = [1, 1, 1]} : vector<2x8x32xf32> to vector<2x8x8xf32>
    "tpu.trace_start"() <{level = 10 : i32, message = "bqd,bkd->bqk"}> : () -> ()
    %cst_89 = arith.constant dense<0.000000e+00> : vector<2x8x8xf32>
    %225 = tpu.matmul %222, %223, %cst_89 {dimension_numbers = #tpu.dot_dimension_numbers<[2], [2], [1], [1], [0, 0, 0, 1, 1, 1], [0], [0]>} : vector<2x8x8xf32>, vector<2x8x8xf32>, vector<2x8x8xf32> -> vector<2x8x8xf32>
    "tpu.trace_stop"() : () -> ()
    %cst_90 = arith.constant dense<0xFF800000> : vector<2x8xf32>
    %226 = vector.multi_reduction <maximumf>, %225, %cst_90 [2] : vector<2x8x8xf32> to vector<2x8xf32>
    %227 = vector.shape_cast %226 : vector<2x8xf32> to vector<2x8x1xf32>
    %228 = vector.broadcast %227 : vector<2x8x1xf32> to vector<2x8x8xf32>
    %229 = arith.subf %225, %228 : vector<2x8x8xf32>
    %230 = math.exp %229 : vector<2x8x8xf32>
    %cst_91 = arith.constant dense<0.000000e+00> : vector<2x8xf32>
    %231 = vector.multi_reduction <add>, %230, %cst_91 [2] : vector<2x8x8xf32> to vector<2x8xf32>
    %232 = vector.shape_cast %231 : vector<2x8xf32> to vector<2x8x1xf32>
    %233 = tpu.reciprocal %232 {approx = true} : vector<2x8x1xf32> -> vector<2x8x1xf32>
    %234 = vector.broadcast %233 : vector<2x8x1xf32> to vector<2x8x8xf32>
    %235 = arith.mulf %230, %234 : vector<2x8x8xf32>
    "tpu.trace_start"() <{level = 10 : i32, message = "bqk,bkd->bqd"}> : () -> ()
    %cst_92 = arith.constant dense<0.000000e+00> : vector<2x8x8xf32>
    %236 = tpu.matmul %235, %224, %cst_92 {dimension_numbers = #tpu.dot_dimension_numbers<[2], [1], [1], [2], [0, 0, 0, 1, 1, 2], [0], [0]>} : vector<2x8x8xf32>, vector<2x8x8xf32>, vector<2x8x8xf32> -> vector<2x8x8xf32>
    "tpu.trace_stop"() : () -> ()
    %237 = vector.extract_strided_slice %189 {offsets = [0, 0, 24], sizes = [2, 8, 8], strides = [1, 1, 1]} : vector<2x8x32xf32> to vector<2x8x8xf32>
    %238 = vector.extract_strided_slice %190 {offsets = [0, 0, 24], sizes = [2, 8, 8], strides = [1, 1, 1]} : vector<2x8x32xf32> to vector<2x8x8xf32>
    %239 = vector.extract_strided_slice %191 {offsets = [0, 0, 24], sizes = [2, 8, 8], strides = [1, 1, 1]} : vector<2x8x32xf32> to vector<2x8x8xf32>
    "tpu.trace_start"() <{level = 10 : i32, message = "bqd,bkd->bqk"}> : () -> ()
    %cst_93 = arith.constant dense<0.000000e+00> : vector<2x8x8xf32>
    %240 = tpu.matmul %237, %238, %cst_93 {dimension_numbers = #tpu.dot_dimension_numbers<[2], [2], [1], [1], [0, 0, 0, 1, 1, 1], [0], [0]>} : vector<2x8x8xf32>, vector<2x8x8xf32>, vector<2x8x8xf32> -> vector<2x8x8xf32>
    "tpu.trace_stop"() : () -> ()
    %cst_94 = arith.constant dense<0xFF800000> : vector<2x8xf32>
    %241 = vector.multi_reduction <maximumf>, %240, %cst_94 [2] : vector<2x8x8xf32> to vector<2x8xf32>
    %242 = vector.shape_cast %241 : vector<2x8xf32> to vector<2x8x1xf32>
    %243 = vector.broadcast %242 : vector<2x8x1xf32> to vector<2x8x8xf32>
    %244 = arith.subf %240, %243 : vector<2x8x8xf32>
    %245 = math.exp %244 : vector<2x8x8xf32>
    %cst_95 = arith.constant dense<0.000000e+00> : vector<2x8xf32>
    %246 = vector.multi_reduction <add>, %245, %cst_95 [2] : vector<2x8x8xf32> to vector<2x8xf32>
    %247 = vector.shape_cast %246 : vector<2x8xf32> to vector<2x8x1xf32>
    %248 = tpu.reciprocal %247 {approx = true} : vector<2x8x1xf32> -> vector<2x8x1xf32>
    %249 = vector.broadcast %248 : vector<2x8x1xf32> to vector<2x8x8xf32>
    %250 = arith.mulf %245, %249 : vector<2x8x8xf32>
    "tpu.trace_start"() <{level = 10 : i32, message = "bqk,bkd->bqd"}> : () -> ()
    %cst_96 = arith.constant dense<0.000000e+00> : vector<2x8x8xf32>
    %251 = tpu.matmul %250, %239, %cst_96 {dimension_numbers = #tpu.dot_dimension_numbers<[2], [1], [1], [2], [0, 0, 0, 1, 1, 2], [0], [0]>} : vector<2x8x8xf32>, vector<2x8x8xf32>, vector<2x8x8xf32> -> vector<2x8x8xf32>
    "tpu.trace_stop"() : () -> ()
    %252 = tpu.concatenate %206, %221, %236, %251 in 2 : vector<2x8x8xf32>, vector<2x8x8xf32>, vector<2x8x8xf32>, vector<2x8x8xf32> -> vector<2x8x32xf32>
    %253 = vector.shape_cast %252 : vector<2x8x32xf32> to vector<16x32xf32>
    %254 = arith.truncf %253 : vector<16x32xf32> to vector<16x32xbf16>
    %cst_97 = arith.constant dense<0.000000e+00> : vector<16x32xf32>
    %255 = tpu.matmul %254, %152, %cst_97 {dimension_numbers = #tpu.dot_dimension_numbers<[1], [0], [0], [1], [0, 0, 1, 1], [], []>} : vector<16x32xbf16>, vector<32x32xbf16>, vector<16x32xf32> -> vector<16x32xf32>
    %256 = vector.broadcast %161 : vector<1x32xf32> to vector<16x32xf32>
    %257 = arith.addf %255, %256 : vector<16x32xf32>
    %258 = arith.addf %148, %257 : vector<16x32xf32>
    %259 = arith.mulf %258, %258 : vector<16x32xf32>
    %cst_98 = arith.constant dense<0.000000e+00> : vector<16xf32>
    %260 = vector.multi_reduction <add>, %259, %cst_98 [1] : vector<16x32xf32> to vector<16xf32>
    %261 = vector.shape_cast %260 : vector<16xf32> to vector<16x1xf32>
    %cst_99 = arith.constant 3.200000e+01 : f32
    %262 = vector.broadcast %cst_99 : f32 to vector<16x1xf32>
    %263 = arith.divf %261, %262 : vector<16x1xf32>
    %cst_100 = arith.constant 9.99999997E-7 : f32
    %264 = vector.broadcast %cst_100 : f32 to vector<16x1xf32>
    %265 = arith.addf %263, %264 : vector<16x1xf32>
    %266 = math.rsqrt %265 : vector<16x1xf32>
    %267 = vector.broadcast %266 : vector<16x1xf32> to vector<16x32xf32>
    %268 = arith.mulf %258, %267 : vector<16x32xf32>
    %269 = vector.broadcast %158 : vector<1x32xf32> to vector<16x32xf32>
    %270 = arith.mulf %269, %268 : vector<16x32xf32>
    %271 = arith.truncf %270 : vector<16x32xf32> to vector<16x32xbf16>
    %cst_101 = arith.constant dense<0.000000e+00> : vector<16x512xf32>
    %272 = tpu.matmul %271, %154, %cst_101 {dimension_numbers = #tpu.dot_dimension_numbers<[1], [0], [0], [1], [0, 0, 1, 1], [], []>} : vector<16x32xbf16>, vector<32x512xbf16>, vector<16x512xf32> -> vector<16x512xf32>
    %273 = vector.broadcast %162 : vector<1x512xf32> to vector<16x512xf32>
    %274 = arith.addf %272, %273 : vector<16x512xf32>
    %275 = vector.extract_strided_slice %274 {offsets = [0, 0], sizes = [16, 256], strides = [1, 1]} : vector<16x512xf32> to vector<16x256xf32>
    %276 = vector.extract_strided_slice %274 {offsets = [0, 256], sizes = [16, 256], strides = [1, 1]} : vector<16x512xf32> to vector<16x256xf32>
    %277 = arith.negf %275 : vector<16x256xf32>
    %278 = math.exp %277 : vector<16x256xf32>
    %cst_102 = arith.constant 1.000000e+00 : f32
    %279 = vector.broadcast %cst_102 : f32 to vector<16x256xf32>
    %280 = arith.addf %279, %278 : vector<16x256xf32>
    %281 = arith.divf %279, %280 : vector<16x256xf32>
    %282 = arith.mulf %275, %281 : vector<16x256xf32>
    %283 = arith.mulf %282, %276 : vector<16x256xf32>
    %284 = arith.truncf %283 : vector<16x256xf32> to vector<16x256xbf16>
    %cst_103 = arith.constant dense<0.000000e+00> : vector<16x32xf32>
    %285 = tpu.matmul %284, %156, %cst_103 {dimension_numbers = #tpu.dot_dimension_numbers<[1], [0], [0], [1], [0, 0, 1, 1], [], []>} : vector<16x256xbf16>, vector<256x32xbf16>, vector<16x32xf32> -> vector<16x32xf32>
    %286 = arith.addf %258, %285 : vector<16x32xf32>
    %287 = vector.broadcast %163 : vector<1x32xf32> to vector<16x32xf32>
    %288 = arith.addf %286, %287 : vector<16x32xf32>
    %c0_104 = arith.constant 0 : index
    %c0_105 = arith.constant 0 : index
    %289 = vector.load %arg6[%c0_104, %c0_105] : memref<1x256xf32, #tpu.memory_space<vmem>>, vector<1x32xf32>
    %c0_106 = arith.constant 0 : index
    %c128_107 = arith.constant 128 : index
    %290 = vector.load %arg6[%c0_106, %c128_107] : memref<1x256xf32, #tpu.memory_space<vmem>>, vector<1x128xf32>
    %291 = arith.mulf %288, %288 : vector<16x32xf32>
    %cst_108 = arith.constant dense<0.000000e+00> : vector<16xf32>
    %292 = vector.multi_reduction <add>, %291, %cst_108 [1] : vector<16x32xf32> to vector<16xf32>
    %293 = vector.shape_cast %292 : vector<16xf32> to vector<16x1xf32>
    %cst_109 = arith.constant 3.200000e+01 : f32
    %294 = vector.broadcast %cst_109 : f32 to vector<16x1xf32>
    %295 = arith.divf %293, %294 : vector<16x1xf32>
    %cst_110 = arith.constant 9.99999997E-7 : f32
    %296 = vector.broadcast %cst_110 : f32 to vector<16x1xf32>
    %297 = arith.addf %295, %296 : vector<16x1xf32>
    %298 = math.rsqrt %297 : vector<16x1xf32>
    %299 = vector.broadcast %298 : vector<16x1xf32> to vector<16x32xf32>
    %300 = arith.mulf %288, %299 : vector<16x32xf32>
    %301 = vector.broadcast %289 : vector<1x32xf32> to vector<16x32xf32>
    %302 = arith.mulf %301, %300 : vector<16x32xf32>
    %303 = arith.truncf %302 : vector<16x32xf32> to vector<16x32xbf16>
    %c0_111 = arith.constant 0 : index
    %c0_112 = arith.constant 0 : index
    %304 = vector.load %arg5[%c0_111, %c0_112] : memref<32x128xbf16, #tpu.memory_space<vmem>>, vector<32x128xbf16>
    %cst_113 = arith.constant dense<0.000000e+00> : vector<16x128xf32>
    %305 = tpu.matmul %303, %304, %cst_113 {dimension_numbers = #tpu.dot_dimension_numbers<[1], [0], [0], [1], [0, 0, 1, 1], [], []>} : vector<16x32xbf16>, vector<32x128xbf16>, vector<16x128xf32> -> vector<16x128xf32>
    %306 = vector.broadcast %290 : vector<1x128xf32> to vector<16x128xf32>
    %307 = arith.addf %305, %306 : vector<16x128xf32>
    %c0_114 = arith.constant 0 : index
    %c0_115 = arith.constant 0 : index
    %308 = vector.load %arg7[%c0_114, %c0_115] : memref<16x128xf32, #tpu.memory_space<vmem>>, vector<16x128xf32>
    tpu.vector_store %arg7[%c0_114, %c0_115], %307 {strides = array<i32>} : memref<16x128xf32, #tpu.memory_space<vmem>>, vector<16x128xf32>,
    return
  }
}

</mosaic_0001>

<llo_original>
// kernel: transformer_forward.1
$region0: #{transformer_forward.1}
  #allocation0 [shape = 'u32[]', space=smem, size = 0x4, offset = 0x4, fixed_abs, tag = 'smem constant byte address 0x4 - core index']
  #allocation1 [shape = 'u32[72,128]{1,0:T(1,128)}', space=vmem, size = 0x9000, scoped, tag = 'internal scratch']
  %s0 = inlined_call_operand.vmem [shape: s32[16,1], index: 0, kind: input, shape index: {}]
  %s1 = inlined_call_operand.vmem [shape: bf16[64,32], index: 1, kind: input, shape index: {}]
  %s2 = inlined_call_operand.vmem [shape: bf16[2,32,768], index: 2, kind: input, shape index: {}]
  %s3 = inlined_call_operand.vmem [shape: bf16[2,256,32], index: 3, kind: input, shape index: {}]
  %s4 = inlined_call_operand.vmem [shape: f32[2,1280], index: 4, kind: input, shape index: {}]
  %s5 = inlined_call_operand.vmem [shape: bf16[32,128], index: 5, kind: input, shape index: {}]
  %s6 = inlined_call_operand.vmem [shape: f32[1,256], index: 6, kind: input, shape index: {}]
  %s7 = inlined_call_operand.hbm [shape: f32[16,128], index: 7, kind: output, shape index: {}]
  %s8 = sld [smem:[#allocation0]]
  $region38: #{transformer_forward.1} parent=0
    _
  %s10 = ssub.s32 1, %s8
  %s11 = scalar_select 0, %s10, %s8
  $region1: #{transformer_forward.1} parent=0
    #allocation2 [shape = 'u8[8192]{0}', space=vmem, size = 0x2000, scoped, tag = 'output window, operand 0, single buffered']
    #allocation3 [shape = 's32[1]{0}', space=sflag, size = 0x4, scoped, tag = 'scoped memory for transformer_forward.1']
    %12 = vsyncpa [#allocation3], 0
    // Predicated region
    $region2: #{transformer_forward.1} parent=1 // pred_check
      _
    $region3: #{transformer_forward.1} parent=1 // pred_check_branch
      %14 = sbr.rel (0) target = $region5
    $region4: #{transformer_forward.1} parent=1 // pred_region
      _
    $region5: #{transformer_forward.1} parent=1 // pred_fallthru
      _
    // Predicated region
    $region6: #{transformer_forward.1} parent=1 // pred_check
      _
    $region7: #{transformer_forward.1} parent=1 // pred_check_branch
      %16 = sbr.rel (0) target = $region9
    $region8: #{transformer_forward.1} parent=1 // pred_region
      _
    $region9: #{transformer_forward.1} parent=1 // pred_fallthru
      _
    // Predicated region
    $region10: #{transformer_forward.1} parent=1 // pred_check
      _
    $region11: #{transformer_forward.1} parent=1 // pred_check_branch
      %18 = sbr.rel (0) target = $region13
    $region12: #{transformer_forward.1} parent=1 // pred_region
      _
    $region13: #{transformer_forward.1} parent=1 // pred_fallthru
      _
    // Predicated region
    $region14: #{transformer_forward.1} parent=1 // pred_check
      _
    $region15: #{transformer_forward.1} parent=1 // pred_check_branch
      %20 = sbr.rel (0) target = $region17
    $region16: #{transformer_forward.1} parent=1 // pred_region
      _
    $region17: #{transformer_forward.1} parent=1 // pred_fallthru
      _
    // Predicated region
    $region18: #{transformer_forward.1} parent=1 // pred_check
      _
    $region19: #{transformer_forward.1} parent=1 // pred_check_branch
      %22 = sbr.rel (0) target = $region21
    $region20: #{transformer_forward.1} parent=1 // pred_region
      _
    $region21: #{transformer_forward.1} parent=1 // pred_fallthru
      _
    // Predicated region
    $region22: #{transformer_forward.1} parent=1 // pred_check
      _
    $region23: #{transformer_forward.1} parent=1 // pred_check_branch
      %24 = sbr.rel (0) target = $region25
    $region24: #{transformer_forward.1} parent=1 // pred_region
      _
    $region25: #{transformer_forward.1} parent=1 // pred_fallthru
      _
    // Predicated region
    $region26: #{transformer_forward.1} parent=1 // pred_check
      _
    $region27: #{transformer_forward.1} parent=1 // pred_check_branch
      %26 = sbr.rel (0) target = $region29
    $region28: #{transformer_forward.1} parent=1 // pred_region
      _
    $region29: #{transformer_forward.1} parent=1 // pred_fallthru
      _
    %v28 = vld [vmem:[%s0] sm:$0xff]
    %v29 = vld [vmem:[%s0 + $0x8] sm:$0xff]
    %v30 = vlaneseq
    %v31 = vand.u32 %v30, 127
    %32 = vset.pattern.permute.xlu0 0
    %33 = vperm.xlu0 %32, %v28
    %v34 = vpop.permute.xlu0 %33
    %35 = vset.pattern.permute.xlu0 0
    %36 = vperm.xlu0 %35, %v29
    %v37 = vpop.permute.xlu0 %36
    %vm38 = vcmp.eq.s32.totalorder %v31, %v34
    %vm39 = vcmp.eq.s32.totalorder %v31, %v37
    %v40 = vsel %vm38, 1, 0
    %v41 = vsel %vm39, 1, 0
    %v42 = vcvt.s32.f32 %v40
    %v43 = vcvt.s32.f32 %v41
    %v44 = vpack.c.bf16 %v43, %v42
    %v45 = vld [vmem:[%s1] sm:$0xf]
    %v46 = vld [vmem:[%s1 + $0x4] sm:$0xf]
    %v47 = vld [vmem:[%s1 + $0x8] sm:$0xf]
    %v48 = vld [vmem:[%s1 + $0xc] sm:$0xf]
    %v49 = vld [vmem:[%s1 + $0x10] sm:$0xf]
    %v50 = vld [vmem:[%s1 + $0x14] sm:$0xf]
    %v51 = vld [vmem:[%s1 + $0x18] sm:$0xf]
    %v52 = vld [vmem:[%s1 + $0x1c] sm:$0xf]
    %v61 = vunpack.c.l.b16 %v45
    %v62 = vunpack.c.l.b16 %v46
    %v63 = vunpack.c.l.b16 %v47
    %v64 = vunpack.c.l.b16 %v48
    %v65 = vunpack.c.l.b16 %v49
    %v66 = vunpack.c.l.b16 %v50
    %v67 = vunpack.c.l.b16 %v51
    %v68 = vunpack.c.l.b16 %v52
    %v69 = vpack.c.b16 %v62, %v61
    %v70 = vpack.c.b16 %v64, %v63
    %v71 = vpack.c.b16 %v66, %v65
    %v72 = vpack.c.b16 %v68, %v67
    %vm77 = vcmask 523264
    %v79 = vsel %vm77, %v44, 0
    %81 = vmatpush.bf16.msra.mxu0 0
    %82 = vmatpush.bf16.msra.mxu0 0
    %83 = vmatpush.bf16.msra.mxu0 0
    %84 = vmatpush.bf16.msra.mxu0 0
    %85 = vmatpush.bf16.msra.mxu0 %v72
    %86 = vmatpush.bf16.msra.mxu0 %v71
    %87 = vmatpush.bf16.msra.mxu0 %v70
    %88 = vmatpush.bf16.msra.mxu0 %v69
    %89 = vmatmul.bf16.gmra.mxu0 %v79
    %v90 = vpop.f32.mrf.mxu0
    %v91 = vadd.f32 0.0, %v90
    %v92 = vpop.f32.mrf.mxu0
    %v93 = vadd.f32 0.0, %v92
    %94 = vdwg.mxu0
    %v95 = vld [vmem:[%s2] sm:$0xf]
    %v96 = vld [vmem:[%s2 + $0x18] sm:$0xf]
    %v97 = vld [vmem:[%s2 + $0x30] sm:$0xf]
    %v98 = vld [vmem:[%s2 + $0x48] sm:$0xf]
    %v99 = vld [vmem:[%s2 + $0x4] sm:$0xf]
    %v100 = vld [vmem:[%s2 + $0x1c] sm:$0xf]
    %v101 = vld [vmem:[%s2 + $0x34] sm:$0xf]
    %v102 = vld [vmem:[%s2 + $0x4c] sm:$0xf]
    %v103 = vld [vmem:[%s2 + $0x8] sm:$0xff]
    %v104 = vld [vmem:[%s2 + $0x10] sm:$0xff]
    %v105 = vld [vmem:[%s2 + $0x20] sm:$0xff]
    %v106 = vld [vmem:[%s2 + $0x28] sm:$0xff]
    %v107 = vld [vmem:[%s2 + $0x38] sm:$0xff]
    %v108 = vld [vmem:[%s2 + $0x40] sm:$0xff]
    %v109 = vld [vmem:[%s2 + $0x50] sm:$0xff]
    %v110 = vld [vmem:[%s2 + $0x58] sm:$0xff]
    %v111 = vld [vmem:[%s3] sm:$0xf]
    %v112 = vld [vmem:[%s3 + $0x4] sm:$0xf]
    %v113 = vld [vmem:[%s3 + $0x8] sm:$0xf]
    %v114 = vld [vmem:[%s3 + $0xc] sm:$0xf]
    %v115 = vld [vmem:[%s3 + $0x10] sm:$0xf]
    %v116 = vld [vmem:[%s3 + $0x14] sm:$0xf]
    %v117 = vld [vmem:[%s3 + $0x18] sm:$0xf]
    %v118 = vld [vmem:[%s3 + $0x1c] sm:$0xf]
    %v119 = vld [vmem:[%s3 + $0x20] sm:$0xf]
    %v120 = vld [vmem:[%s3 + $0x24] sm:$0xf]
    %v121 = vld [vmem:[%s3 + $0x28] sm:$0xf]
    %v122 = vld [vmem:[%s3 + $0x2c] sm:$0xf]
    %v123 = vld [vmem:[%s3 + $0x30] sm:$0xf]
    %v124 = vld [vmem:[%s3 + $0x34] sm:$0xf]
    %v125 = vld [vmem:[%s3 + $0x38] sm:$0xf]
    %v126 = vld [vmem:[%s3 + $0x3c] sm:$0xf]
    %v127 = vld [vmem:[%s3 + $0x40] sm:$0xf]
    %v128 = vld [vmem:[%s3 + $0x44] sm:$0xf]
    %v129 = vld [vmem:[%s3 + $0x48] sm:$0xf]
    %v130 = vld [vmem:[%s3 + $0x4c] sm:$0xf]
    %v131 = vld [vmem:[%s3 + $0x50] sm:$0xf]
    %v132 = vld [vmem:[%s3 + $0x54] sm:$0xf]
    %v133 = vld [vmem:[%s3 + $0x58] sm:$0xf]
    %v134 = vld [vmem:[%s3 + $0x5c] sm:$0xf]
    %v135 = vld [vmem:[%s3 + $0x60] sm:$0xf]
    %v136 = vld [vmem:[%s3 + $0x64] sm:$0xf]
    %v137 = vld [vmem:[%s3 + $0x68] sm:$0xf]
    %v138 = vld [vmem:[%s3 + $0x6c] sm:$0xf]
    %v139 = vld [vmem:[%s3 + $0x70] sm:$0xf]
    %v140 = vld [vmem:[%s3 + $0x74] sm:$0xf]
    %v141 = vld [vmem:[%s3 + $0x78] sm:$0xf]
    %v142 = vld [vmem:[%s3 + $0x7c] sm:$0xf]
    %v143 = vld [vmem:[%s4] sm:$0x1]
    %v144 = vld [vmem:[%s4 + $0x2] sm:$0x1]
    %v145 = vld [vmem:[%s4 + $0x4] sm:$0x1]
    %v146 = vld [vmem:[%s4 + $0x6] sm:$0x1]
    %v147 = vld [vmem:[%s4 + $0x8] sm:$0x1]
    %s148 = scalar_lea.vmem %s4, 10
    %v149 = vld [vmem:[%s148] ss:$2 sm:$0xf]
    %v150 = vld [vmem:[%s4 + $0x12] sm:$0x1]
    %v151 = vmul.f32 %v91, %v91
    %v152 = vmul.f32 %v93, %v93
    %vm153 = vcmask 261120
    %v154 = vsel %vm153, %v151, 0.0
    %155 = vadd.xlane.f32.xlu0 %v154
    %v156 = vpop.xlane.xlu0 %155
    %v157 = vsel %vm153, %v152, 0.0
    %158 = vadd.xlane.f32.xlu0 %v157
    %v159 = vpop.xlane.xlu0 %158
    %v160 = vrcp.pop 32.0
    %v161 = vmul.f32 32.0, %v160
    %v162 = vsub.f32 1.0, %v161
    %v163 = vmul.f32 %v160, %v162
    %v164 = vadd.f32 %v160, %v163
    %vm165 = vweird.f32 %v160
    %v166 = vsel %vm165, %v160, %v164
    %v167 = vmul.f32 %v156, %v166
    %v168 = vmul.f32 %v159, %v166
    %v169 = vadd.f32 %v167, 1e-06
    %v170 = vadd.f32 %v168, 1e-06
    %v171 = vrsqrt.pop %v169
    %v172 = vmul.f32 %v171, %v169
    %v173 = vmul.f32 %v172, %v171
    %v174 = vmul.f32 0.5, %v173
    %v175 = vsub.f32 1.5, %v174
    %v176 = vmul.f32 %v171, %v175
    %vm177 = vweird.f32 %v169
    %vm178 = vweird.f32 %v171
    %vm179 = vmor %vm177, %vm178
    %v180 = vsel %vm179, %v171, %v176
    %v181 = vrsqrt.pop %v170
    %v182 = vmul.f32 %v181, %v170
    %v183 = vmul.f32 %v182, %v181
    %v184 = vmul.f32 0.5, %v183
    %v185 = vsub.f32 1.5, %v184
    %v186 = vmul.f32 %v181, %v185
    %vm187 = vweird.f32 %v170
    %vm188 = vweird.f32 %v181
    %vm189 = vmor %vm187, %vm188
    %v190 = vsel %vm189, %v181, %v186
    %v191 = vmul.f32 %v91, %v180
    %v192 = vmul.f32 %v93, %v190
    %v193 = vperm.slane %v143, 0
    %v194 = vmul.f32 %v193, %v191
    %v195 = vmul.f32 %v193, %v192
    %v196 = vpack.c.bf16 %v195, %v194
    %v197 = vperm.slane %v146, 0
    %v202 = vunpack.c.l.b16 %v95
    %v203 = vunpack.c.l.b16 %v96
    %v204 = vunpack.c.l.b16 %v97
    %v205 = vunpack.c.l.b16 %v98
    %v206 = vpack.c.b16 %v203, %v202
    %v207 = vpack.c.b16 %v205, %v204
    %v211 = vsel %vm153, %v196, 0
    %213 = vmatpush.bf16.msra.mxu0 0
    %214 = vmatpush.bf16.msra.mxu0 0
    %215 = vmatpush.bf16.msra.mxu0 0
    %216 = vmatpush.bf16.msra.mxu0 0
    %217 = vmatpush.bf16.msra.mxu0 0
    %218 = vmatpush.bf16.msra.mxu0 0
    %219 = vmatpush.bf16.msra.mxu0 %v207
    %220 = vmatpush.bf16.msra.mxu0 %v206
    %221 = vmatmul.bf16.gmra.mxu0 %v211
    %v222 = vpop.f32.mrf.mxu0
    %v223 = vadd.f32 %v197, %v222
    %v224 = vpop.f32.mrf.mxu0
    %v225 = vadd.f32 %v197, %v224
    %226 = vdwg.mxu0
    %v227 = vperm.slane %v145, 0
    %v228 = vadd.f32 %v223, %v227
    %v229 = vadd.f32 %v225, %v227
    %v230 = vmul.f32 %v228, 0.35355338
    %v231 = vmul.f32 %v229, 0.35355338
    %233 = vrot.lane.b32.xlu0 %v227, 32
    %v234 = vpop.permute.xlu0 %233
    %v236 = vadd.f32 %v223, %v234
    %v237 = vadd.f32 %v225, %v234
    %239 = vrot.lane.b32.xlu0 %v236, 96
    %v240 = vpop.permute.xlu0 %239
    %vm241 = vcmask 64512
    %v243 = vsel %vm241, %v230, 0
    %v245 = vsel %vm241, %v240, 0
    %247 = vmatpush.xpose.msra.mxu0 0.0
    %248 = vmatpush.xpose.msra.mxu0 0.0
    %249 = vmatpush.xpose.msra.mxu0 0.0
    %250 = vmatpush.xpose.msra.mxu0 0.0
    %251 = vmatpush.xpose.msra.mxu0 0.0
    %252 = vmatpush.xpose.msra.mxu0 0.0
    %253 = vmatpush.xpose.msra.mxu0 0.0
    %254 = vmatpush.xpose.msra.mxu0 0.0
    %255 = vmatpush.xpose.msra.mxu0 0.0
    %256 = vmatpush.xpose.msra.mxu0 0.0
    %257 = vmatpush.xpose.msra.mxu0 0.0
    %258 = vmatpush.xpose.msra.mxu0 0.0
    %259 = vmatpush.xpose.msra.mxu0 0.0
    %260 = vmatpush.xpose.msra.mxu0 0.0
    %261 = vmatpush.xpose.msra.mxu0 0.0
    %262 = vmatpush.xpose.msra.mxu0 %v245
    %263 = vmatmul.f32.gmra.mxu0 %v243
    %v264 = vpop.f32.mrf.mxu0
    %v265 = vadd.f32 0.0, %v264
    %266 = vdwg.mxu0
    %268 = vrot.lane.b32.xlu0 %v237, 96
    %v269 = vpop.permute.xlu0 %268
    %v271 = vsel %vm241, %v231, 0
    %v273 = vsel %vm241, %v269, 0
    %275 = vmatpush.xpose.msra.mxu0 0.0
    %276 = vmatpush.xpose.msra.mxu0 0.0
    %277 = vmatpush.xpose.msra.mxu0 0.0
    %278 = vmatpush.xpose.msra.mxu0 0.0
    %279 = vmatpush.xpose.msra.mxu0 0.0
    %280 = vmatpush.xpose.msra.mxu0 0.0
    %281 = vmatpush.xpose.msra.mxu0 0.0
    %282 = vmatpush.xpose.msra.mxu0 0.0
    %283 = vmatpush.xpose.msra.mxu0 0.0
    %284 = vmatpush.xpose.msra.mxu0 0.0
    %285 = vmatpush.xpose.msra.mxu0 0.0
    %286 = vmatpush.xpose.msra.mxu0 0.0
    %287 = vmatpush.xpose.msra.mxu0 0.0
    %288 = vmatpush.xpose.msra.mxu0 0.0
    %289 = vmatpush.xpose.msra.mxu0 0.0
    %290 = vmatpush.xpose.msra.mxu0 %v273
    %291 = vmatmul.f32.gmra.mxu0 %v271
    %v292 = vpop.f32.mrf.mxu0
    %v293 = vadd.f32 0.0, %v292
    %294 = vdwg.mxu0
    %v295 = vsel %vm241, %v265, -inf
    %296 = vmax.xlane.f32.xlu0 %v295
    %v297 = vpop.xlane.xlu0 %296
    %v298 = vsel %vm241, %v293, -inf
    %299 = vmax.xlane.f32.xlu0 %v298
    %v300 = vpop.xlane.xlu0 %299
    %v301 = vsub.f32 %v265, %v297
    %v302 = vsub.f32 %v293, %v300
    %v303 = vmul.f32 %v301, 1.442695
    %v304 = vpow.pop %v303
    %v305 = vmul.f32 %v302, 1.442695
    %v306 = vpow.pop %v305
    %v307 = vsel %vm241, %v304, 0.0
    %308 = vadd.xlane.f32.xlu0 %v307
    %v309 = vpop.xlane.xlu0 %308
    %v310 = vsel %vm241, %v306, 0.0
    %311 = vadd.xlane.f32.xlu0 %v310
    %v312 = vpop.xlane.xlu0 %311
    %v313 = vrcp.pop %v309
    %v314 = vrcp.pop %v312
    %v315 = vmul.f32 %v304, %v313
    %v316 = vmul.f32 %v306, %v314
    %318 = vrot.lane.b32.xlu0 %v223, 64
    %v319 = vpop.permute.xlu0 %318
    %v322 = vsel %vm241, %v315, 0
    %324 = vmatpush.msra.mxu0 0.0
    %325 = vmatpush.msra.mxu0 0.0
    %326 = vmatpush.msra.mxu0 0.0
    %327 = vmatpush.msra.mxu0 0.0
    %328 = vmatpush.msra.mxu0 0.0
    %329 = vmatpush.msra.mxu0 0.0
    %330 = vmatpush.msra.mxu0 0.0
    %331 = vmatpush.msra.mxu0 0.0
    %332 = vmatpush.msra.mxu0 0.0
    %333 = vmatpush.msra.mxu0 0.0
    %334 = vmatpush.msra.mxu0 0.0
    %335 = vmatpush.msra.mxu0 0.0
    %336 = vmatpush.msra.mxu0 0.0
    %337 = vmatpush.msra.mxu0 0.0
    %338 = vmatpush.msra.mxu0 0.0
    %339 = vmatpush.msra.mxu0 %v319
    %340 = vmatmul.f32.gmra.mxu0 %v322
    %v341 = vpop.f32.mrf.mxu0
    %v342 = vadd.f32 0.0, %v341
    %343 = vdwg.mxu0
    %345 = vrot.lane.b32.xlu0 %v225, 64
    %v346 = vpop.permute.xlu0 %345
    %v349 = vsel %vm241, %v316, 0
    %351 = vmatpush.msra.mxu0 0.0
    %352 = vmatpush.msra.mxu0 0.0
    %353 = vmatpush.msra.mxu0 0.0
    %354 = vmatpush.msra.mxu0 0.0
    %355 = vmatpush.msra.mxu0 0.0
    %356 = vmatpush.msra.mxu0 0.0
    %357 = vmatpush.msra.mxu0 0.0
    %358 = vmatpush.msra.mxu0 0.0
    %359 = vmatpush.msra.mxu0 0.0
    %360 = vmatpush.msra.mxu0 0.0
    %361 = vmatpush.msra.mxu0 0.0
    %362 = vmatpush.msra.mxu0 0.0
    %363 = vmatpush.msra.mxu0 0.0
    %364 = vmatpush.msra.mxu0 0.0
    %365 = vmatpush.msra.mxu0 0.0
    %366 = vmatpush.msra.mxu0 %v346
    %367 = vmatmul.f32.gmra.mxu0 %v349
    %v368 = vpop.f32.mrf.mxu0
    %v369 = vadd.f32 0.0, %v368
    %370 = vdwg.mxu0
    %371 = vrot.lane.b32.xlu0 %v230, 120
    %v372 = vpop.permute.xlu0 %371
    %373 = vrot.lane.b32.xlu0 %v236, 88
    %v374 = vpop.permute.xlu0 %373
    %v375 = vsel %vm241, %v372, 0
    %v377 = vsel %vm241, %v374, 0
    %379 = vmatpush.xpose.msra.mxu0 0.0
    %380 = vmatpush.xpose.msra.mxu0 0.0
    %381 = vmatpush.xpose.msra.mxu0 0.0
    %382 = vmatpush.xpose.msra.mxu0 0.0
    %383 = vmatpush.xpose.msra.mxu0 0.0
    %384 = vmatpush.xpose.msra.mxu0 0.0
    %385 = vmatpush.xpose.msra.mxu0 0.0
    %386 = vmatpush.xpose.msra.mxu0 0.0
    %387 = vmatpush.xpose.msra.mxu0 0.0
    %388 = vmatpush.xpose.msra.mxu0 0.0
    %389 = vmatpush.xpose.msra.mxu0 0.0
    %390 = vmatpush.xpose.msra.mxu0 0.0
    %391 = vmatpush.xpose.msra.mxu0 0.0
    %392 = vmatpush.xpose.msra.mxu0 0.0
    %393 = vmatpush.xpose.msra.mxu0 0.0
    %394 = vmatpush.xpose.msra.mxu0 %v377
    %395 = vmatmul.f32.gmra.mxu0 %v375
    %v396 = vpop.f32.mrf.mxu0
    %v397 = vadd.f32 0.0, %v396
    %398 = vdwg.mxu0
    %399 = vrot.lane.b32.xlu0 %v231, 120
    %v400 = vpop.permute.xlu0 %399
    %401 = vrot.lane.b32.xlu0 %v237, 88
    %v402 = vpop.permute.xlu0 %401
    %v403 = vsel %vm241, %v400, 0
    %v405 = vsel %vm241, %v402, 0
    %407 = vmatpush.xpose.msra.mxu0 0.0
    %408 = vmatpush.xpose.msra.mxu0 0.0
    %409 = vmatpush.xpose.msra.mxu0 0.0
    %410 = vmatpush.xpose.msra.mxu0 0.0
    %411 = vmatpush.xpose.msra.mxu0 0.0
    %412 = vmatpush.xpose.msra.mxu0 0.0
    %413 = vmatpush.xpose.msra.mxu0 0.0
    %414 = vmatpush.xpose.msra.mxu0 0.0
    %415 = vmatpush.xpose.msra.mxu0 0.0
    %416 = vmatpush.xpose.msra.mxu0 0.0
    %417 = vmatpush.xpose.msra.mxu0 0.0
    %418 = vmatpush.xpose.msra.mxu0 0.0
    %419 = vmatpush.xpose.msra.mxu0 0.0
    %420 = vmatpush.xpose.msra.mxu0 0.0
    %421 = vmatpush.xpose.msra.mxu0 0.0
    %422 = vmatpush.xpose.msra.mxu0 %v405
    %423 = vmatmul.f32.gmra.mxu0 %v403
    %v424 = vpop.f32.mrf.mxu0
    %v425 = vadd.f32 0.0, %v424
    %426 = vdwg.mxu0
    %v427 = vsel %vm241, %v397, -inf
    %428 = vmax.xlane.f32.xlu0 %v427
    %v429 = vpop.xlane.xlu0 %428
    %v430 = vsel %vm241, %v425, -inf
    %431 = vmax.xlane.f32.xlu0 %v430
    %v432 = vpop.xlane.xlu0 %431
    %v433 = vsub.f32 %v397, %v429
    %v434 = vsub.f32 %v425, %v432
    %v435 = vmul.f32 %v433, 1.442695
    %v436 = vpow.pop %v435
    %v437 = vmul.f32 %v434, 1.442695
    %v438 = vpow.pop %v437
    %v439 = vsel %vm241, %v436, 0.0
    %440 = vadd.xlane.f32.xlu0 %v439
    %v441 = vpop.xlane.xlu0 %440
    %v442 = vsel %vm241, %v438, 0.0
    %443 = vadd.xlane.f32.xlu0 %v442
    %v444 = vpop.xlane.xlu0 %443
    %v445 = vrcp.pop %v441
    %v446 = vrcp.pop %v444
    %v447 = vmul.f32 %v436, %v445
    %v448 = vmul.f32 %v438, %v446
    %449 = vrot.lane.b32.xlu0 %v223, 56
    %v450 = vpop.permute.xlu0 %449
    %v453 = vsel %vm241, %v447, 0
    %455 = vmatpush.msra.mxu0 0.0
    %456 = vmatpush.msra.mxu0 0.0
    %457 = vmatpush.msra.mxu0 0.0
    %458 = vmatpush.msra.mxu0 0.0
    %459 = vmatpush.msra.mxu0 0.0
    %460 = vmatpush.msra.mxu0 0.0
    %461 = vmatpush.msra.mxu0 0.0
    %462 = vmatpush.msra.mxu0 0.0
    %463 = vmatpush.msra.mxu0 0.0
    %464 = vmatpush.msra.mxu0 0.0
    %465 = vmatpush.msra.mxu0 0.0
    %466 = vmatpush.msra.mxu0 0.0
    %467 = vmatpush.msra.mxu0 0.0
    %468 = vmatpush.msra.mxu0 0.0
    %469 = vmatpush.msra.mxu0 0.0
    %470 = vmatpush.msra.mxu0 %v450
    %471 = vmatmul.f32.gmra.mxu0 %v453
    %v472 = vpop.f32.mrf.mxu0
    %v473 = vadd.f32 0.0, %v472
    %474 = vdwg.mxu0
    %475 = vrot.lane.b32.xlu0 %v225, 56
    %v476 = vpop.permute.xlu0 %475
    %v479 = vsel %vm241, %v448, 0
    %481 = vmatpush.msra.mxu0 0.0
    %482 = vmatpush.msra.mxu0 0.0
    %483 = vmatpush.msra.mxu0 0.0
    %484 = vmatpush.msra.mxu0 0.0
    %485 = vmatpush.msra.mxu0 0.0
    %486 = vmatpush.msra.mxu0 0.0
    %487 = vmatpush.msra.mxu0 0.0
    %488 = vmatpush.msra.mxu0 0.0
    %489 = vmatpush.msra.mxu0 0.0
    %490 = vmatpush.msra.mxu0 0.0
    %491 = vmatpush.msra.mxu0 0.0
    %492 = vmatpush.msra.mxu0 0.0
    %493 = vmatpush.msra.mxu0 0.0
    %494 = vmatpush.msra.mxu0 0.0
    %495 = vmatpush.msra.mxu0 0.0
    %496 = vmatpush.msra.mxu0 %v476
    %497 = vmatmul.f32.gmra.mxu0 %v479
    %v498 = vpop.f32.mrf.mxu0
    %v499 = vadd.f32 0.0, %v498
    %500 = vdwg.mxu0
    %501 = vrot.lane.b32.xlu0 %v230, 112
    %v502 = vpop.permute.xlu0 %501
    %503 = vrot.lane.b32.xlu0 %v236, 80
    %v504 = vpop.permute.xlu0 %503
    %v505 = vsel %vm241, %v502, 0
    %v507 = vsel %vm241, %v504, 0
    %509 = vmatpush.xpose.msra.mxu0 0.0
    %510 = vmatpush.xpose.msra.mxu0 0.0
    %511 = vmatpush.xpose.msra.mxu0 0.0
    %512 = vmatpush.xpose.msra.mxu0 0.0
    %513 = vmatpush.xpose.msra.mxu0 0.0
    %514 = vmatpush.xpose.msra.mxu0 0.0
    %515 = vmatpush.xpose.msra.mxu0 0.0
    %516 = vmatpush.xpose.msra.mxu0 0.0
    %517 = vmatpush.xpose.msra.mxu0 0.0
    %518 = vmatpush.xpose.msra.mxu0 0.0
    %519 = vmatpush.xpose.msra.mxu0 0.0
    %520 = vmatpush.xpose.msra.mxu0 0.0
    %521 = vmatpush.xpose.msra.mxu0 0.0
    %522 = vmatpush.xpose.msra.mxu0 0.0
    %523 = vmatpush.xpose.msra.mxu0 0.0
    %524 = vmatpush.xpose.msra.mxu0 %v507
    %525 = vmatmul.f32.gmra.mxu0 %v505
    %v526 = vpop.f32.mrf.mxu0
    %v527 = vadd.f32 0.0, %v526
    %528 = vdwg.mxu0
    %529 = vrot.lane.b32.xlu0 %v231, 112
    %v530 = vpop.permute.xlu0 %529
    %531 = vrot.lane.b32.xlu0 %v237, 80
    %v532 = vpop.permute.xlu0 %531
    %v533 = vsel %vm241, %v530, 0
    %v535 = vsel %vm241, %v532, 0
    %537 = vmatpush.xpose.msra.mxu0 0.0
    %538 = vmatpush.xpose.msra.mxu0 0.0
    %539 = vmatpush.xpose.msra.mxu0 0.0
    %540 = vmatpush.xpose.msra.mxu0 0.0
    %541 = vmatpush.xpose.msra.mxu0 0.0
    %542 = vmatpush.xpose.msra.mxu0 0.0
    %543 = vmatpush.xpose.msra.mxu0 0.0
    %544 = vmatpush.xpose.msra.mxu0 0.0
    %545 = vmatpush.xpose.msra.mxu0 0.0
    %546 = vmatpush.xpose.msra.mxu0 0.0
    %547 = vmatpush.xpose.msra.mxu0 0.0
    %548 = vmatpush.xpose.msra.mxu0 0.0
    %549 = vmatpush.xpose.msra.mxu0 0.0
    %550 = vmatpush.xpose.msra.mxu0 0.0
    %551 = vmatpush.xpose.msra.mxu0 0.0
    %552 = vmatpush.xpose.msra.mxu0 %v535
    %553 = vmatmul.f32.gmra.mxu0 %v533
    %v554 = vpop.f32.mrf.mxu0
    %v555 = vadd.f32 0.0, %v554
    %556 = vdwg.mxu0
    %v557 = vsel %vm241, %v527, -inf
    %558 = vmax.xlane.f32.xlu0 %v557
    %v559 = vpop.xlane.xlu0 %558
    %v560 = vsel %vm241, %v555, -inf
    %561 = vmax.xlane.f32.xlu0 %v560
    %v562 = vpop.xlane.xlu0 %561
    %v563 = vsub.f32 %v527, %v559
    %v564 = vsub.f32 %v555, %v562
    %v565 = vmul.f32 %v563, 1.442695
    %v566 = vpow.pop %v565
    %v567 = vmul.f32 %v564, 1.442695
    %v568 = vpow.pop %v567
    %v569 = vsel %vm241, %v566, 0.0
    %570 = vadd.xlane.f32.xlu0 %v569
    %v571 = vpop.xlane.xlu0 %570
    %v572 = vsel %vm241, %v568, 0.0
    %573 = vadd.xlane.f32.xlu0 %v572
    %v574 = vpop.xlane.xlu0 %573
    %v575 = vrcp.pop %v571
    %v576 = vrcp.pop %v574
    %v577 = vmul.f32 %v566, %v575
    %v578 = vmul.f32 %v568, %v576
    %579 = vrot.lane.b32.xlu0 %v223, 48
    %v580 = vpop.permute.xlu0 %579
    %v583 = vsel %vm241, %v577, 0
    %585 = vmatpush.msra.mxu0 0.0
    %586 = vmatpush.msra.mxu0 0.0
    %587 = vmatpush.msra.mxu0 0.0
    %588 = vmatpush.msra.mxu0 0.0
    %589 = vmatpush.msra.mxu0 0.0
    %590 = vmatpush.msra.mxu0 0.0
    %591 = vmatpush.msra.mxu0 0.0
    %592 = vmatpush.msra.mxu0 0.0
    %593 = vmatpush.msra.mxu0 0.0
    %594 = vmatpush.msra.mxu0 0.0
    %595 = vmatpush.msra.mxu0 0.0
    %596 = vmatpush.msra.mxu0 0.0
    %597 = vmatpush.msra.mxu0 0.0
    %598 = vmatpush.msra.mxu0 0.0
    %599 = vmatpush.msra.mxu0 0.0
    %600 = vmatpush.msra.mxu0 %v580
    %601 = vmatmul.f32.gmra.mxu0 %v583
    %v602 = vpop.f32.mrf.mxu0
    %v603 = vadd.f32 0.0, %v602
    %604 = vdwg.mxu0
    %605 = vrot.lane.b32.xlu0 %v225, 48
    %v606 = vpop.permute.xlu0 %605
    %v609 = vsel %vm241, %v578, 0
    %611 = vmatpush.msra.mxu0 0.0
    %612 = vmatpush.msra.mxu0 0.0
    %613 = vmatpush.msra.mxu0 0.0
    %614 = vmatpush.msra.mxu0 0.0
    %615 = vmatpush.msra.mxu0 0.0
    %616 = vmatpush.msra.mxu0 0.0
    %617 = vmatpush.msra.mxu0 0.0
    %618 = vmatpush.msra.mxu0 0.0
    %619 = vmatpush.msra.mxu0 0.0
    %620 = vmatpush.msra.mxu0 0.0
    %621 = vmatpush.msra.mxu0 0.0
    %622 = vmatpush.msra.mxu0 0.0
    %623 = vmatpush.msra.mxu0 0.0
    %624 = vmatpush.msra.mxu0 0.0
    %625 = vmatpush.msra.mxu0 0.0
    %626 = vmatpush.msra.mxu0 %v606
    %627 = vmatmul.f32.gmra.mxu0 %v609
    %v628 = vpop.f32.mrf.mxu0
    %v629 = vadd.f32 0.0, %v628
    %630 = vdwg.mxu0
    %631 = vrot.lane.b32.xlu0 %v230, 104
    %v632 = vpop.permute.xlu0 %631
    %633 = vrot.lane.b32.xlu0 %v236, 72
    %v634 = vpop.permute.xlu0 %633
    %v635 = vsel %vm241, %v632, 0
    %v637 = vsel %vm241, %v634, 0
    %639 = vmatpush.xpose.msra.mxu0 0.0
    %640 = vmatpush.xpose.msra.mxu0 0.0
    %641 = vmatpush.xpose.msra.mxu0 0.0
    %642 = vmatpush.xpose.msra.mxu0 0.0
    %643 = vmatpush.xpose.msra.mxu0 0.0
    %644 = vmatpush.xpose.msra.mxu0 0.0
    %645 = vmatpush.xpose.msra.mxu0 0.0
    %646 = vmatpush.xpose.msra.mxu0 0.0
    %647 = vmatpush.xpose.msra.mxu0 0.0
    %648 = vmatpush.xpose.msra.mxu0 0.0
    %649 = vmatpush.xpose.msra.mxu0 0.0
    %650 = vmatpush.xpose.msra.mxu0 0.0
    %651 = vmatpush.xpose.msra.mxu0 0.0
    %652 = vmatpush.xpose.msra.mxu0 0.0
    %653 = vmatpush.xpose.msra.mxu0 0.0
    %654 = vmatpush.xpose.msra.mxu0 %v637
    %655 = vmatmul.f32.gmra.mxu0 %v635
    %v656 = vpop.f32.mrf.mxu0
    %v657 = vadd.f32 0.0, %v656
    %658 = vdwg.mxu0
    %659 = vrot.lane.b32.xlu0 %v231, 104
    %v660 = vpop.permute.xlu0 %659
    %661 = vrot.lane.b32.xlu0 %v237, 72
    %v662 = vpop.permute.xlu0 %661
    %v663 = vsel %vm241, %v660, 0
    %v665 = vsel %vm241, %v662, 0
    %667 = vmatpush.xpose.msra.mxu0 0.0
    %668 = vmatpush.xpose.msra.mxu0 0.0
    %669 = vmatpush.xpose.msra.mxu0 0.0
    %670 = vmatpush.xpose.msra.mxu0 0.0
    %671 = vmatpush.xpose.msra.mxu0 0.0
    %672 = vmatpush.xpose.msra.mxu0 0.0
    %673 = vmatpush.xpose.msra.mxu0 0.0
    %674 = vmatpush.xpose.msra.mxu0 0.0
    %675 = vmatpush.xpose.msra.mxu0 0.0
    %676 = vmatpush.xpose.msra.mxu0 0.0
    %677 = vmatpush.xpose.msra.mxu0 0.0
    %678 = vmatpush.xpose.msra.mxu0 0.0
    %679 = vmatpush.xpose.msra.mxu0 0.0
    %680 = vmatpush.xpose.msra.mxu0 0.0
    %681 = vmatpush.xpose.msra.mxu0 0.0
    %682 = vmatpush.xpose.msra.mxu0 %v665
    %683 = vmatmul.f32.gmra.mxu0 %v663
    %v684 = vpop.f32.mrf.mxu0
    %v685 = vadd.f32 0.0, %v684
    %686 = vdwg.mxu0
    %v687 = vsel %vm241, %v657, -inf
    %688 = vmax.xlane.f32.xlu0 %v687
    %v689 = vpop.xlane.xlu0 %688
    %v690 = vsel %vm241, %v685, -inf
    %691 = vmax.xlane.f32.xlu0 %v690
    %v692 = vpop.xlane.xlu0 %691
    %v693 = vsub.f32 %v657, %v689
    %v694 = vsub.f32 %v685, %v692
    %v695 = vmul.f32 %v693, 1.442695
    %v696 = vpow.pop %v695
    %v697 = vmul.f32 %v694, 1.442695
    %v698 = vpow.pop %v697
    %v699 = vsel %vm241, %v696, 0.0
    %700 = vadd.xlane.f32.xlu0 %v699
    %v701 = vpop.xlane.xlu0 %700
    %v702 = vsel %vm241, %v698, 0.0
    %703 = vadd.xlane.f32.xlu0 %v702
    %v704 = vpop.xlane.xlu0 %703
    %v705 = vrcp.pop %v701
    %v706 = vrcp.pop %v704
    %v707 = vmul.f32 %v696, %v705
    %v708 = vmul.f32 %v698, %v706
    %709 = vrot.lane.b32.xlu0 %v223, 40
    %v710 = vpop.permute.xlu0 %709
    %v713 = vsel %vm241, %v707, 0
    %715 = vmatpush.msra.mxu0 0.0
    %716 = vmatpush.msra.mxu0 0.0
    %717 = vmatpush.msra.mxu0 0.0
    %718 = vmatpush.msra.mxu0 0.0
    %719 = vmatpush.msra.mxu0 0.0
    %720 = vmatpush.msra.mxu0 0.0
    %721 = vmatpush.msra.mxu0 0.0
    %722 = vmatpush.msra.mxu0 0.0
    %723 = vmatpush.msra.mxu0 0.0
    %724 = vmatpush.msra.mxu0 0.0
    %725 = vmatpush.msra.mxu0 0.0
    %726 = vmatpush.msra.mxu0 0.0
    %727 = vmatpush.msra.mxu0 0.0
    %728 = vmatpush.msra.mxu0 0.0
    %729 = vmatpush.msra.mxu0 0.0
    %730 = vmatpush.msra.mxu0 %v710
    %731 = vmatmul.f32.gmra.mxu0 %v713
    %v732 = vpop.f32.mrf.mxu0
    %v733 = vadd.f32 0.0, %v732
    %734 = vdwg.mxu0
    %735 = vrot.lane.b32.xlu0 %v225, 40
    %v736 = vpop.permute.xlu0 %735
    %v739 = vsel %vm241, %v708, 0
    %741 = vmatpush.msra.mxu0 0.0
    %742 = vmatpush.msra.mxu0 0.0
    %743 = vmatpush.msra.mxu0 0.0
    %744 = vmatpush.msra.mxu0 0.0
    %745 = vmatpush.msra.mxu0 0.0
    %746 = vmatpush.msra.mxu0 0.0
    %747 = vmatpush.msra.mxu0 0.0
    %748 = vmatpush.msra.mxu0 0.0
    %749 = vmatpush.msra.mxu0 0.0
    %750 = vmatpush.msra.mxu0 0.0
    %751 = vmatpush.msra.mxu0 0.0
    %752 = vmatpush.msra.mxu0 0.0
    %753 = vmatpush.msra.mxu0 0.0
    %754 = vmatpush.msra.mxu0 0.0
    %755 = vmatpush.msra.mxu0 0.0
    %756 = vmatpush.msra.mxu0 %v736
    %757 = vmatmul.f32.gmra.mxu0 %v739
    %v758 = vpop.f32.mrf.mxu0
    %v759 = vadd.f32 0.0, %v758
    %760 = vdwg.mxu0
    %763 = vrot.lane.b32.xlu0 %v473, 8
    %v764 = vpop.permute.xlu0 %763
    %765 = vrot.lane.b32.xlu0 %v499, 8
    %v766 = vpop.permute.xlu0 %765
    %771 = vrot.lane.b32.xlu0 %v603, 16
    %v772 = vpop.permute.xlu0 %771
    %773 = vrot.lane.b32.xlu0 %v629, 16
    %v774 = vpop.permute.xlu0 %773
    %779 = vrot.lane.b32.xlu0 %v733, 24
    %v780 = vpop.permute.xlu0 %779
    %781 = vrot.lane.b32.xlu0 %v759, 24
    %v782 = vpop.permute.xlu0 %781
    %v785 = vsel %vm241, %v342, %v764
    %v786 = vsel %vm241, %v369, %v766
    %vm787 = vcmask 130048
    %v788 = vsel %vm787, %v785, %v772
    %v789 = vsel %vm787, %v786, %v774
    %vm790 = vcmask 195584
    %v791 = vsel %vm790, %v788, %v780
    %v792 = vsel %vm790, %v789, %v782
    %v793 = vpack.c.bf16 %v792, %v791
    %v794 = vperm.slane %v147, 0
    %v799 = vunpack.c.l.b16 %v99
    %v800 = vunpack.c.l.b16 %v100
    %v801 = vunpack.c.l.b16 %v101
    %v802 = vunpack.c.l.b16 %v102
    %v803 = vpack.c.b16 %v800, %v799
    %v804 = vpack.c.b16 %v802, %v801
    %v808 = vsel %vm153, %v793, 0
    %810 = vmatpush.bf16.msra.mxu0 0
    %811 = vmatpush.bf16.msra.mxu0 0
    %812 = vmatpush.bf16.msra.mxu0 0
    %813 = vmatpush.bf16.msra.mxu0 0
    %814 = vmatpush.bf16.msra.mxu0 0
    %815 = vmatpush.bf16.msra.mxu0 0
    %816 = vmatpush.bf16.msra.mxu0 %v804
    %817 = vmatpush.bf16.msra.mxu0 %v803
    %818 = vmatmul.bf16.gmra.mxu0 %v808
    %v819 = vpop.f32.mrf.mxu0
    %v820 = vadd.f32 %v794, %v819
    %v821 = vpop.f32.mrf.mxu0
    %v822 = vadd.f32 %v794, %v821
    %823 = vdwg.mxu0
    %v824 = vadd.f32 %v91, %v820
    %v825 = vadd.f32 %v93, %v822
    %v826 = vmul.f32 %v824, %v824
    %v827 = vmul.f32 %v825, %v825
    %v828 = vsel %vm153, %v826, 0.0
    %829 = vadd.xlane.f32.xlu0 %v828
    %v830 = vpop.xlane.xlu0 %829
    %v831 = vsel %vm153, %v827, 0.0
    %832 = vadd.xlane.f32.xlu0 %v831
    %v833 = vpop.xlane.xlu0 %832
    %v834 = vmul.f32 %v830, %v166
    %v835 = vmul.f32 %v833, %v166
    %v836 = vadd.f32 %v834, 1e-06
    %v837 = vadd.f32 %v835, 1e-06
    %v838 = vrsqrt.pop %v836
    %v839 = vmul.f32 %v838, %v836
    %v840 = vmul.f32 %v839, %v838
    %v841 = vmul.f32 0.5, %v840
    %v842 = vsub.f32 1.5, %v841
    %v843 = vmul.f32 %v838, %v842
    %vm844 = vweird.f32 %v836
    %vm845 = vweird.f32 %v838
    %vm846 = vmor %vm844, %vm845
    %v847 = vsel %vm846, %v838, %v843
    %v848 = vrsqrt.pop %v837
    %v849 = vmul.f32 %v848, %v837
    %v850 = vmul.f32 %v849, %v848
    %v851 = vmul.f32 0.5, %v850
    %v852 = vsub.f32 1.5, %v851
    %v853 = vmul.f32 %v848, %v852
    %vm854 = vweird.f32 %v837
    %vm855 = vweird.f32 %v848
    %vm856 = vmor %vm854, %vm855
    %v857 = vsel %vm856, %v848, %v853
    %v858 = vmul.f32 %v824, %v847
    %v859 = vmul.f32 %v825, %v857
    %v860 = vperm.slane %v144, 0
    %v861 = vmul.f32 %v860, %v858
    %v862 = vmul.f32 %v860, %v859
    %v863 = vpack.c.bf16 %v862, %v861
    %v865 = vperm.slane %v149, 0
    %v866 = vperm.slane %v149, 1
    %v867 = vperm.slane %v149, 2
    %v868 = vperm.slane %v149, 3
    %v881 = vunpack.c.l.b16 %v103
    %v882 = vunpack.c.h.b16 %v103
    %v883 = vunpack.c.l.b16 %v104
    %v884 = vunpack.c.h.b16 %v104
    %v885 = vunpack.c.l.b16 %v105
    %v886 = vunpack.c.h.b16 %v105
    %v887 = vunpack.c.l.b16 %v106
    %v888 = vunpack.c.h.b16 %v106
    %v889 = vunpack.c.l.b16 %v107
    %v890 = vunpack.c.h.b16 %v107
    %v891 = vunpack.c.l.b16 %v108
    %v892 = vunpack.c.h.b16 %v108
    %v893 = vunpack.c.l.b16 %v109
    %v894 = vunpack.c.h.b16 %v109
    %v895 = vunpack.c.l.b16 %v110
    %v896 = vunpack.c.h.b16 %v110
    %v897 = vpack.c.b16 %v885, %v881
    %v898 = vpack.c.b16 %v886, %v882
    %v899 = vpack.c.b16 %v887, %v883
    %v900 = vpack.c.b16 %v888, %v884
    %v901 = vpack.c.b16 %v893, %v889
    %v902 = vpack.c.b16 %v894, %v890
    %v903 = vpack.c.b16 %v895, %v891
    %v904 = vpack.c.b16 %v896, %v892
    %v914 = vsel %vm153, %v863, 0
    %916 = vmatpush.bf16.msra.mxu0 0
    %917 = vmatpush.bf16.msra.mxu0 0
    %918 = vmatpush.bf16.msra.mxu0 0
    %919 = vmatpush.bf16.msra.mxu0 0
    %920 = vmatpush.bf16.msra.mxu0 0
    %921 = vmatpush.bf16.msra.mxu0 0
    %922 = vmatpush.bf16.msra.mxu0 %v901
    %923 = vmatpush.bf16.msra.mxu0 %v897
    %924 = vmatmul.bf16.gmra.mxu0 %v914
    %v925 = vpop.f32.mrf.mxu0
    %v926 = vadd.f32 %v865, %v925
    %v927 = vpop.f32.mrf.mxu0
    %v928 = vadd.f32 %v865, %v927
    %929 = vdwg.mxu0
    %930 = vmatpush.bf16.msra.mxu0 0
    %931 = vmatpush.bf16.msra.mxu0 0
    %932 = vmatpush.bf16.msra.mxu0 0
    %933 = vmatpush.bf16.msra.mxu0 0
    %934 = vmatpush.bf16.msra.mxu0 0
    %935 = vmatpush.bf16.msra.mxu0 0
    %936 = vmatpush.bf16.msra.mxu0 %v902
    %937 = vmatpush.bf16.msra.mxu0 %v898
    %938 = vmatmul.bf16.gmra.mxu0 %v914
    %v939 = vpop.f32.mrf.mxu0
    %v940 = vadd.f32 %v866, %v939
    %v941 = vpop.f32.mrf.mxu0
    %v942 = vadd.f32 %v866, %v941
    %943 = vdwg.mxu0
    %944 = vmatpush.bf16.msra.mxu0 0
    %945 = vmatpush.bf16.msra.mxu0 0
    %946 = vmatpush.bf16.msra.mxu0 0
    %947 = vmatpush.bf16.msra.mxu0 0
    %948 = vmatpush.bf16.msra.mxu0 0
    %949 = vmatpush.bf16.msra.mxu0 0
    %950 = vmatpush.bf16.msra.mxu0 %v903
    %951 = vmatpush.bf16.msra.mxu0 %v899
    %952 = vmatmul.bf16.gmra.mxu0 %v914
    %v953 = vpop.f32.mrf.mxu0
    %v954 = vadd.f32 %v867, %v953
    %v955 = vpop.f32.mrf.mxu0
    %v956 = vadd.f32 %v867, %v955
    %957 = vdwg.mxu0
    %958 = vmatpush.bf16.msra.mxu0 0
    %959 = vmatpush.bf16.msra.mxu0 0
    %960 = vmatpush.bf16.msra.mxu0 0
    %961 = vmatpush.bf16.msra.mxu0 0
    %962 = vmatpush.bf16.msra.mxu0 0
    %963 = vmatpush.bf16.msra.mxu0 0
    %964 = vmatpush.bf16.msra.mxu0 %v904
    %965 = vmatpush.bf16.msra.mxu0 %v900
    %966 = vmatmul.bf16.gmra.mxu0 %v914
    %v967 = vpop.f32.mrf.mxu0
    %v968 = vadd.f32 %v868, %v967
    %v969 = vpop.f32.mrf.mxu0
    %v970 = vadd.f32 %v868, %v969
    %971 = vdwg.mxu0
    %v972 = vxor.u32 %v926, 2147483648
    %v973 = vxor.u32 %v940, 2147483648
    %v974 = vxor.u32 %v928, 2147483648
    %v975 = vxor.u32 %v942, 2147483648
    %v976 = vmul.f32 %v972, 1.442695
    %v977 = vpow.pop %v976
    %v978 = vmul.f32 %v973, 1.442695
    %v979 = vpow.pop %v978
    %v980 = vmul.f32 %v974, 1.442695
    %v981 = vpow.pop %v980
    %v982 = vmul.f32 %v975, 1.442695
    %v983 = vpow.pop %v982
    %v984 = vadd.f32 %v977, 1.0
    %v985 = vadd.f32 %v979, 1.0
    %v986 = vadd.f32 %v981, 1.0
    %v987 = vadd.f32 %v983, 1.0
    %v988 = vrcp.pop %v984
    %v989 = vmul.f32 %v984, %v988
    %v990 = vsub.f32 1.0, %v989
    %v991 = vmul.f32 %v988, %v990
    %v992 = vadd.f32 %v988, %v991
    %vm993 = vweird.f32 %v984
    %vm994 = vweird.f32 %v988
    %vm995 = vmor %vm993, %vm994
    %v996 = vsel %vm995, %v988, %v992
    %v997 = vand.u32 2147483647, %v984
    %vm998 = vcmp.eq.f32.partialorder %v997, 8.507059e+37
    %v999 = vand.u32 %v984, 2147483648
    %v1000 = vor.u32 1.1754944e-38, %v999
    %v1001 = vsel %vm998, %v1000, %v996
    %v1002 = vmul.f32 1.0, %v1001
    %v1003 = vrcp.pop %v985
    %v1004 = vmul.f32 %v985, %v1003
    %v1005 = vsub.f32 1.0, %v1004
    %v1006 = vmul.f32 %v1003, %v1005
    %v1007 = vadd.f32 %v1003, %v1006
    %vm1008 = vweird.f32 %v985
    %vm1009 = vweird.f32 %v1003
    %vm1010 = vmor %vm1008, %vm1009
    %v1011 = vsel %vm1010, %v1003, %v1007
    %v1012 = vand.u32 2147483647, %v985
    %vm1013 = vcmp.eq.f32.partialorder %v1012, 8.507059e+37
    %v1014 = vand.u32 %v985, 2147483648
    %v1015 = vor.u32 1.1754944e-38, %v1014
    %v1016 = vsel %vm1013, %v1015, %v1011
    %v1017 = vmul.f32 1.0, %v1016
    %v1018 = vrcp.pop %v986
    %v1019 = vmul.f32 %v986, %v1018
    %v1020 = vsub.f32 1.0, %v1019
    %v1021 = vmul.f32 %v1018, %v1020
    %v1022 = vadd.f32 %v1018, %v1021
    %vm1023 = vweird.f32 %v986
    %vm1024 = vweird.f32 %v1018
    %vm1025 = vmor %vm1023, %vm1024
    %v1026 = vsel %vm1025, %v1018, %v1022
    %v1027 = vand.u32 2147483647, %v986
    %vm1028 = vcmp.eq.f32.partialorder %v1027, 8.507059e+37
    %v1029 = vand.u32 %v986, 2147483648
    %v1030 = vor.u32 1.1754944e-38, %v1029
    %v1031 = vsel %vm1028, %v1030, %v1026
    %v1032 = vmul.f32 1.0, %v1031
    %v1033 = vrcp.pop %v987
    %v1034 = vmul.f32 %v987, %v1033
    %v1035 = vsub.f32 1.0, %v1034
    %v1036 = vmul.f32 %v1033, %v1035
    %v1037 = vadd.f32 %v1033, %v1036
    %vm1038 = vweird.f32 %v987
    %vm1039 = vweird.f32 %v1033
    %vm1040 = vmor %vm1038, %vm1039
    %v1041 = vsel %vm1040, %v1033, %v1037
    %v1042 = vand.u32 2147483647, %v987
    %vm1043 = vcmp.eq.f32.partialorder %v1042, 8.507059e+37
    %v1044 = vand.u32 %v987, 2147483648
    %v1045 = vor.u32 1.1754944e-38, %v1044
    %v1046 = vsel %vm1043, %v1045, %v1041
    %v1047 = vmul.f32 1.0, %v1046
    %v1048 = vmul.f32 %v926, %v1002
    %v1049 = vmul.f32 %v940, %v1017
    %v1050 = vmul.f32 %v928, %v1032
    %v1051 = vmul.f32 %v942, %v1047
    %v1052 = vmul.f32 %v1048, %v954
    %v1053 = vmul.f32 %v1049, %v968
    %v1054 = vmul.f32 %v1050, %v956
    %v1055 = vmul.f32 %v1051, %v970
    %v1056 = vpack.c.bf16 %v1054, %v1052
    %v1057 = vpack.c.bf16 %v1055, %v1053
    %v1090 = vunpack.c.l.b16 %v111
    %v1091 = vunpack.c.l.b16 %v112
    %v1092 = vunpack.c.l.b16 %v113
    %v1093 = vunpack.c.l.b16 %v114
    %v1094 = vunpack.c.l.b16 %v115
    %v1095 = vunpack.c.l.b16 %v116
    %v1096 = vunpack.c.l.b16 %v117
    %v1097 = vunpack.c.l.b16 %v118
    %v1098 = vunpack.c.l.b16 %v119
    %v1099 = vunpack.c.l.b16 %v120
    %v1100 = vunpack.c.l.b16 %v121
    %v1101 = vunpack.c.l.b16 %v122
    %v1102 = vunpack.c.l.b16 %v123
    %v1103 = vunpack.c.l.b16 %v124
    %v1104 = vunpack.c.l.b16 %v125
    %v1105 = vunpack.c.l.b16 %v126
    %v1106 = vunpack.c.l.b16 %v127
    %v1107 = vunpack.c.l.b16 %v128
    %v1108 = vunpack.c.l.b16 %v129
    %v1109 = vunpack.c.l.b16 %v130
    %v1110 = vunpack.c.l.b16 %v131
    %v1111 = vunpack.c.l.b16 %v132
    %v1112 = vunpack.c.l.b16 %v133
    %v1113 = vunpack.c.l.b16 %v134
    %v1114 = vunpack.c.l.b16 %v135
    %v1115 = vunpack.c.l.b16 %v136
    %v1116 = vunpack.c.l.b16 %v137
    %v1117 = vunpack.c.l.b16 %v138
    %v1118 = vunpack.c.l.b16 %v139
    %v1119 = vunpack.c.l.b16 %v140
    %v1120 = vunpack.c.l.b16 %v141
    %v1121 = vunpack.c.l.b16 %v142
    %v1122 = vpack.c.b16 %v1091, %v1090
    %v1123 = vpack.c.b16 %v1093, %v1092
    %v1124 = vpack.c.b16 %v1095, %v1094
    %v1125 = vpack.c.b16 %v1097, %v1096
    %v1126 = vpack.c.b16 %v1099, %v1098
    %v1127 = vpack.c.b16 %v1101, %v1100
    %v1128 = vpack.c.b16 %v1103, %v1102
    %v1129 = vpack.c.b16 %v1105, %v1104
    %v1130 = vpack.c.b16 %v1107, %v1106
    %v1131 = vpack.c.b16 %v1109, %v1108
    %v1132 = vpack.c.b16 %v1111, %v1110
    %v1133 = vpack.c.b16 %v1113, %v1112
    %v1134 = vpack.c.b16 %v1115, %v1114
    %v1135 = vpack.c.b16 %v1117, %v1116
    %v1136 = vpack.c.b16 %v1119, %v1118
    %v1137 = vpack.c.b16 %v1121, %v1120
    %1154 = vmatpush.bf16.msra.mxu0 %v1129
    %1155 = vmatpush.bf16.msra.mxu0 %v1128
    %1156 = vmatpush.bf16.msra.mxu0 %v1127
    %1157 = vmatpush.bf16.msra.mxu0 %v1126
    %1158 = vmatpush.bf16.msra.mxu0 %v1125
    %1159 = vmatpush.bf16.msra.mxu0 %v1124
    %1160 = vmatpush.bf16.msra.mxu0 %v1123
    %1161 = vmatpush.bf16.msra.mxu0 %v1122
    %1162 = vmatmul.bf16.gmra.mxu0 %v1056
    %v1163 = vpop.f32.mrf.mxu0
    %v1164 = vadd.f32 0.0, %v1163
    %v1165 = vpop.f32.mrf.mxu0
    %v1166 = vadd.f32 0.0, %v1165
    %1167 = vdwg.mxu0
    %1168 = vmatpush.bf16.msra.mxu0 %v1137
    %1169 = vmatpush.bf16.msra.mxu0 %v1136
    %1170 = vmatpush.bf16.msra.mxu0 %v1135
    %1171 = vmatpush.bf16.msra.mxu0 %v1134
    %1172 = vmatpush.bf16.msra.mxu0 %v1133
    %1173 = vmatpush.bf16.msra.mxu0 %v1132
    %1174 = vmatpush.bf16.msra.mxu0 %v1131
    %1175 = vmatpush.bf16.msra.mxu0 %v1130
    %1176 = vmatmul.bf16.gmra.mxu0 %v1057
    %v1177 = vpop.f32.mrf.mxu0
    %v1178 = vadd.f32 %v1164, %v1177
    %v1179 = vpop.f32.mrf.mxu0
    %v1180 = vadd.f32 %v1166, %v1179
    %1181 = vdwg.mxu0
    %v1182 = vadd.f32 %v824, %v1178
    %v1183 = vadd.f32 %v825, %v1180
    %v1184 = vperm.slane %v150, 0
    %v1185 = vadd.f32 %v1182, %v1184
    %v1186 = vadd.f32 %v1183, %v1184
    %s1187 = scalar_lea.vmem %s2, 96
    %v1188 = vld [vmem:[%s1187] sm:$0xf]
    %v1189 = vld [vmem:[%s1187 + $0x18] sm:$0xf]
    %v1190 = vld [vmem:[%s1187 + $0x30] sm:$0xf]
    %v1191 = vld [vmem:[%s1187 + $0x48] sm:$0xf]
    %v1192 = vld [vmem:[%s1187 + $0x4] sm:$0xf]
    %v1193 = vld [vmem:[%s1187 + $0x1c] sm:$0xf]
    %v1194 = vld [vmem:[%s1187 + $0x34] sm:$0xf]
    %v1195 = vld [vmem:[%s1187 + $0x4c] sm:$0xf]
    %v1196 = vld [vmem:[%s1187 + $0x8] sm:$0xff]
    %v1197 = vld [vmem:[%s1187 + $0x10] sm:$0xff]
    %v1198 = vld [vmem:[%s1187 + $0x20] sm:$0xff]
    %v1199 = vld [vmem:[%s1187 + $0x28] sm:$0xff]
    %v1200 = vld [vmem:[%s1187 + $0x38] sm:$0xff]
    %v1201 = vld [vmem:[%s1187 + $0x40] sm:$0xff]
    %v1202 = vld [vmem:[%s1187 + $0x50] sm:$0xff]
    %v1203 = vld [vmem:[%s1187 + $0x58] sm:$0xff]
    %s1204 = scalar_lea.vmem %s3, 128
    %v1205 = vld [vmem:[%s1204] sm:$0xf]
    %v1206 = vld [vmem:[%s1204 + $0x4] sm:$0xf]
    %v1207 = vld [vmem:[%s1204 + $0x8] sm:$0xf]
    %v1208 = vld [vmem:[%s1204 + $0xc] sm:$0xf]
    %v1209 = vld [vmem:[%s1204 + $0x10] sm:$0xf]
    %v1210 = vld [vmem:[%s1204 + $0x14] sm:$0xf]
    %v1211 = vld [vmem:[%s1204 + $0x18] sm:$0xf]
    %v1212 = vld [vmem:[%s1204 + $0x1c] sm:$0xf]
    %v1213 = vld [vmem:[%s1204 + $0x20] sm:$0xf]
    %v1214 = vld [vmem:[%s1204 + $0x24] sm:$0xf]
    %v1215 = vld [vmem:[%s1204 + $0x28] sm:$0xf]
    %v1216 = vld [vmem:[%s1204 + $0x2c] sm:$0xf]
    %v1217 = vld [vmem:[%s1204 + $0x30] sm:$0xf]
    %v1218 = vld [vmem:[%s1204 + $0x34] sm:$0xf]
    %v1219 = vld [vmem:[%s1204 + $0x38] sm:$0xf]
    %v1220 = vld [vmem:[%s1204 + $0x3c] sm:$0xf]
    %v1221 = vld [vmem:[%s1204 + $0x40] sm:$0xf]
    %v1222 = vld [vmem:[%s1204 + $0x44] sm:$0xf]
    %v1223 = vld [vmem:[%s1204 + $0x48] sm:$0xf]
    %v1224 = vld [vmem:[%s1204 + $0x4c] sm:$0xf]
    %v1225 = vld [vmem:[%s1204 + $0x50] sm:$0xf]
    %v1226 = vld [vmem:[%s1204 + $0x54] sm:$0xf]
    %v1227 = vld [vmem:[%s1204 + $0x58] sm:$0xf]
    %v1228 = vld [vmem:[%s1204 + $0x5c] sm:$0xf]
    %v1229 = vld [vmem:[%s1204 + $0x60] sm:$0xf]
    %v1230 = vld [vmem:[%s1204 + $0x64] sm:$0xf]
    %v1231 = vld [vmem:[%s1204 + $0x68] sm:$0xf]
    %v1232 = vld [vmem:[%s1204 + $0x6c] sm:$0xf]
    %v1233 = vld [vmem:[%s1204 + $0x70] sm:$0xf]
    %v1234 = vld [vmem:[%s1204 + $0x74] sm:$0xf]
    %v1235 = vld [vmem:[%s1204 + $0x78] sm:$0xf]
    %v1236 = vld [vmem:[%s1204 + $0x7c] sm:$0xf]
    %v1237 = vld [vmem:[%s4 + $0x1] sm:$0x1]
    %v1238 = vld [vmem:[%s4 + $0x3] sm:$0x1]
    %v1239 = vld [vmem:[%s4 + $0x5] sm:$0x1]
    %v1240 = vld [vmem:[%s4 + $0x7] sm:$0x1]
    %v1241 = vld [vmem:[%s4 + $0x9] sm:$0x1]
    %s1242 = scalar_lea.vmem %s4, 11
    %v1243 = vld [vmem:[%s1242] ss:$2 sm:$0xf]
    %v1244 = vld [vmem:[%s4 + $0x13] sm:$0x1]
    %v1245 = vmul.f32 %v1185, %v1185
    %v1246 = vmul.f32 %v1186, %v1186
    %v1247 = vsel %vm153, %v1245, 0.0
    %1248 = vadd.xlane.f32.xlu0 %v1247
    %v1249 = vpop.xlane.xlu0 %1248
    %v1250 = vsel %vm153, %v1246, 0.0
    %1251 = vadd.xlane.f32.xlu0 %v1250
    %v1252 = vpop.xlane.xlu0 %1251
    %v1253 = vmul.f32 %v1249, %v166
    %v1254 = vmul.f32 %v1252, %v166
    %v1255 = vadd.f32 %v1253, 1e-06
    %v1256 = vadd.f32 %v1254, 1e-06
    %v1257 = vrsqrt.pop %v1255
    %v1258 = vmul.f32 %v1257, %v1255
    %v1259 = vmul.f32 %v1258, %v1257
    %v1260 = vmul.f32 0.5, %v1259
    %v1261 = vsub.f32 1.5, %v1260
    %v1262 = vmul.f32 %v1257, %v1261
    %vm1263 = vweird.f32 %v1255
    %vm1264 = vweird.f32 %v1257
    %vm1265 = vmor %vm1263, %vm1264
    %v1266 = vsel %vm1265, %v1257, %v1262
    %v1267 = vrsqrt.pop %v1256
    %v1268 = vmul.f32 %v1267, %v1256
    %v1269 = vmul.f32 %v1268, %v1267
    %v1270 = vmul.f32 0.5, %v1269
    %v1271 = vsub.f32 1.5, %v1270
    %v1272 = vmul.f32 %v1267, %v1271
    %vm1273 = vweird.f32 %v1256
    %vm1274 = vweird.f32 %v1267
    %vm1275 = vmor %vm1273, %vm1274
    %v1276 = vsel %vm1275, %v1267, %v1272
    %v1277 = vmul.f32 %v1185, %v1266
    %v1278 = vmul.f32 %v1186, %v1276
    %v1279 = vperm.slane %v1237, 0
    %v1280 = vmul.f32 %v1279, %v1277
    %v1281 = vmul.f32 %v1279, %v1278
    %v1282 = vpack.c.bf16 %v1281, %v1280
    %v1283 = vperm.slane %v1240, 0
    %v1288 = vunpack.c.l.b16 %v1188
    %v1289 = vunpack.c.l.b16 %v1189
    %v1290 = vunpack.c.l.b16 %v1190
    %v1291 = vunpack.c.l.b16 %v1191
    %v1292 = vpack.c.b16 %v1289, %v1288
    %v1293 = vpack.c.b16 %v1291, %v1290
    %v1297 = vsel %vm153, %v1282, 0
    %1299 = vmatpush.bf16.msra.mxu0 0
    %1300 = vmatpush.bf16.msra.mxu0 0
    %1301 = vmatpush.bf16.msra.mxu0 0
    %1302 = vmatpush.bf16.msra.mxu0 0
    %1303 = vmatpush.bf16.msra.mxu0 0
    %1304 = vmatpush.bf16.msra.mxu0 0
    %1305 = vmatpush.bf16.msra.mxu0 %v1293
    %1306 = vmatpush.bf16.msra.mxu0 %v1292
    %1307 = vmatmul.bf16.gmra.mxu0 %v1297
    %v1308 = vpop.f32.mrf.mxu0
    %v1309 = vadd.f32 %v1283, %v1308
    %v1310 = vpop.f32.mrf.mxu0
    %v1311 = vadd.f32 %v1283, %v1310
    %1312 = vdwg.mxu0
    %v1313 = vperm.slane %v1239, 0
    %v1314 = vadd.f32 %v1309, %v1313
    %v1315 = vadd.f32 %v1311, %v1313
    %v1316 = vmul.f32 %v1314, 0.35355338
    %v1317 = vmul.f32 %v1315, 0.35355338
    %1319 = vrot.lane.b32.xlu0 %v1313, 32
    %v1320 = vpop.permute.xlu0 %1319
    %v1322 = vadd.f32 %v1309, %v1320
    %v1323 = vadd.f32 %v1311, %v1320
    %1325 = vrot.lane.b32.xlu0 %v1322, 96
    %v1326 = vpop.permute.xlu0 %1325
    %v1328 = vsel %vm241, %v1316, 0
    %v1330 = vsel %vm241, %v1326, 0
    %1332 = vmatpush.xpose.msra.mxu0 0.0
    %1333 = vmatpush.xpose.msra.mxu0 0.0
    %1334 = vmatpush.xpose.msra.mxu0 0.0
    %1335 = vmatpush.xpose.msra.mxu0 0.0
    %1336 = vmatpush.xpose.msra.mxu0 0.0
    %1337 = vmatpush.xpose.msra.mxu0 0.0
    %1338 = vmatpush.xpose.msra.mxu0 0.0
    %1339 = vmatpush.xpose.msra.mxu0 0.0
    %1340 = vmatpush.xpose.msra.mxu0 0.0
    %1341 = vmatpush.xpose.msra.mxu0 0.0
    %1342 = vmatpush.xpose.msra.mxu0 0.0
    %1343 = vmatpush.xpose.msra.mxu0 0.0
    %1344 = vmatpush.xpose.msra.mxu0 0.0
    %1345 = vmatpush.xpose.msra.mxu0 0.0
    %1346 = vmatpush.xpose.msra.mxu0 0.0
    %1347 = vmatpush.xpose.msra.mxu0 %v1330
    %1348 = vmatmul.f32.gmra.mxu0 %v1328
    %v1349 = vpop.f32.mrf.mxu0
    %v1350 = vadd.f32 0.0, %v1349
    %1351 = vdwg.mxu0
    %1353 = vrot.lane.b32.xlu0 %v1323, 96
    %v1354 = vpop.permute.xlu0 %1353
    %v1356 = vsel %vm241, %v1317, 0
    %v1358 = vsel %vm241, %v1354, 0
    %1360 = vmatpush.xpose.msra.mxu0 0.0
    %1361 = vmatpush.xpose.msra.mxu0 0.0
    %1362 = vmatpush.xpose.msra.mxu0 0.0
    %1363 = vmatpush.xpose.msra.mxu0 0.0
    %1364 = vmatpush.xpose.msra.mxu0 0.0
    %1365 = vmatpush.xpose.msra.mxu0 0.0
    %1366 = vmatpush.xpose.msra.mxu0 0.0
    %1367 = vmatpush.xpose.msra.mxu0 0.0
    %1368 = vmatpush.xpose.msra.mxu0 0.0
    %1369 = vmatpush.xpose.msra.mxu0 0.0
    %1370 = vmatpush.xpose.msra.mxu0 0.0
    %1371 = vmatpush.xpose.msra.mxu0 0.0
    %1372 = vmatpush.xpose.msra.mxu0 0.0
    %1373 = vmatpush.xpose.msra.mxu0 0.0
    %1374 = vmatpush.xpose.msra.mxu0 0.0
    %1375 = vmatpush.xpose.msra.mxu0 %v1358
    %1376 = vmatmul.f32.gmra.mxu0 %v1356
    %v1377 = vpop.f32.mrf.mxu0
    %v1378 = vadd.f32 0.0, %v1377
    %1379 = vdwg.mxu0
    %v1380 = vsel %vm241, %v1350, -inf
    %1381 = vmax.xlane.f32.xlu0 %v1380
    %v1382 = vpop.xlane.xlu0 %1381
    %v1383 = vsel %vm241, %v1378, -inf
    %1384 = vmax.xlane.f32.xlu0 %v1383
    %v1385 = vpop.xlane.xlu0 %1384
    %v1386 = vsub.f32 %v1350, %v1382
    %v1387 = vsub.f32 %v1378, %v1385
    %v1388 = vmul.f32 %v1386, 1.442695
    %v1389 = vpow.pop %v1388
    %v1390 = vmul.f32 %v1387, 1.442695
    %v1391 = vpow.pop %v1390
    %v1392 = vsel %vm241, %v1389, 0.0
    %1393 = vadd.xlane.f32.xlu0 %v1392
    %v1394 = vpop.xlane.xlu0 %1393
    %v1395 = vsel %vm241, %v1391, 0.0
    %1396 = vadd.xlane.f32.xlu0 %v1395
    %v1397 = vpop.xlane.xlu0 %1396
    %v1398 = vrcp.pop %v1394
    %v1399 = vrcp.pop %v1397
    %v1400 = vmul.f32 %v1389, %v1398
    %v1401 = vmul.f32 %v1391, %v1399
    %1403 = vrot.lane.b32.xlu0 %v1309, 64
    %v1404 = vpop.permute.xlu0 %1403
    %v1407 = vsel %vm241, %v1400, 0
    %1409 = vmatpush.msra.mxu0 0.0
    %1410 = vmatpush.msra.mxu0 0.0
    %1411 = vmatpush.msra.mxu0 0.0
    %1412 = vmatpush.msra.mxu0 0.0
    %1413 = vmatpush.msra.mxu0 0.0
    %1414 = vmatpush.msra.mxu0 0.0
    %1415 = vmatpush.msra.mxu0 0.0
    %1416 = vmatpush.msra.mxu0 0.0
    %1417 = vmatpush.msra.mxu0 0.0
    %1418 = vmatpush.msra.mxu0 0.0
    %1419 = vmatpush.msra.mxu0 0.0
    %1420 = vmatpush.msra.mxu0 0.0
    %1421 = vmatpush.msra.mxu0 0.0
    %1422 = vmatpush.msra.mxu0 0.0
    %1423 = vmatpush.msra.mxu0 0.0
    %1424 = vmatpush.msra.mxu0 %v1404
    %1425 = vmatmul.f32.gmra.mxu0 %v1407
    %v1426 = vpop.f32.mrf.mxu0
    %v1427 = vadd.f32 0.0, %v1426
    %1428 = vdwg.mxu0
    %1430 = vrot.lane.b32.xlu0 %v1311, 64
    %v1431 = vpop.permute.xlu0 %1430
    %v1434 = vsel %vm241, %v1401, 0
    %1436 = vmatpush.msra.mxu0 0.0
    %1437 = vmatpush.msra.mxu0 0.0
    %1438 = vmatpush.msra.mxu0 0.0
    %1439 = vmatpush.msra.mxu0 0.0
    %1440 = vmatpush.msra.mxu0 0.0
    %1441 = vmatpush.msra.mxu0 0.0
    %1442 = vmatpush.msra.mxu0 0.0
    %1443 = vmatpush.msra.mxu0 0.0
    %1444 = vmatpush.msra.mxu0 0.0
    %1445 = vmatpush.msra.mxu0 0.0
    %1446 = vmatpush.msra.mxu0 0.0
    %1447 = vmatpush.msra.mxu0 0.0
    %1448 = vmatpush.msra.mxu0 0.0
    %1449 = vmatpush.msra.mxu0 0.0
    %1450 = vmatpush.msra.mxu0 0.0
    %1451 = vmatpush.msra.mxu0 %v1431
    %1452 = vmatmul.f32.gmra.mxu0 %v1434
    %v1453 = vpop.f32.mrf.mxu0
    %v1454 = vadd.f32 0.0, %v1453
    %1455 = vdwg.mxu0
    %1456 = vrot.lane.b32.xlu0 %v1316, 120
    %v1457 = vpop.permute.xlu0 %1456
    %1458 = vrot.lane.b32.xlu0 %v1322, 88
    %v1459 = vpop.permute.xlu0 %1458
    %v1460 = vsel %vm241, %v1457, 0
    %v1462 = vsel %vm241, %v1459, 0
    %1464 = vmatpush.xpose.msra.mxu0 0.0
    %1465 = vmatpush.xpose.msra.mxu0 0.0
    %1466 = vmatpush.xpose.msra.mxu0 0.0
    %1467 = vmatpush.xpose.msra.mxu0 0.0
    %1468 = vmatpush.xpose.msra.mxu0 0.0
    %1469 = vmatpush.xpose.msra.mxu0 0.0
    %1470 = vmatpush.xpose.msra.mxu0 0.0
    %1471 = vmatpush.xpose.msra.mxu0 0.0
    %1472 = vmatpush.xpose.msra.mxu0 0.0
    %1473 = vmatpush.xpose.msra.mxu0 0.0
    %1474 = vmatpush.xpose.msra.mxu0 0.0
    %1475 = vmatpush.xpose.msra.mxu0 0.0
    %1476 = vmatpush.xpose.msra.mxu0 0.0
    %1477 = vmatpush.xpose.msra.mxu0 0.0
    %1478 = vmatpush.xpose.msra.mxu0 0.0
    %1479 = vmatpush.xpose.msra.mxu0 %v1462
    %1480 = vmatmul.f32.gmra.mxu0 %v1460
    %v1481 = vpop.f32.mrf.mxu0
    %v1482 = vadd.f32 0.0, %v1481
    %1483 = vdwg.mxu0
    %1484 = vrot.lane.b32.xlu0 %v1317, 120
    %v1485 = vpop.permute.xlu0 %1484
    %1486 = vrot.lane.b32.xlu0 %v1323, 88
    %v1487 = vpop.permute.xlu0 %1486
    %v1488 = vsel %vm241, %v1485, 0
    %v1490 = vsel %vm241, %v1487, 0
    %1492 = vmatpush.xpose.msra.mxu0 0.0
    %1493 = vmatpush.xpose.msra.mxu0 0.0
    %1494 = vmatpush.xpose.msra.mxu0 0.0
    %1495 = vmatpush.xpose.msra.mxu0 0.0
    %1496 = vmatpush.xpose.msra.mxu0 0.0
    %1497 = vmatpush.xpose.msra.mxu0 0.0
    %1498 = vmatpush.xpose.msra.mxu0 0.0
    %1499 = vmatpush.xpose.msra.mxu0 0.0
    %1500 = vmatpush.xpose.msra.mxu0 0.0
    %1501 = vmatpush.xpose.msra.mxu0 0.0
    %1502 = vmatpush.xpose.msra.mxu0 0.0
    %1503 = vmatpush.xpose.msra.mxu0 0.0
    %1504 = vmatpush.xpose.msra.mxu0 0.0
    %1505 = vmatpush.xpose.msra.mxu0 0.0
    %1506 = vmatpush.xpose.msra.mxu0 0.0
    %1507 = vmatpush.xpose.msra.mxu0 %v1490
    %1508 = vmatmul.f32.gmra.mxu0 %v1488
    %v1509 = vpop.f32.mrf.mxu0
    %v1510 = vadd.f32 0.0, %v1509
    %1511 = vdwg.mxu0
    %v1512 = vsel %vm241, %v1482, -inf
    %1513 = vmax.xlane.f32.xlu0 %v1512
    %v1514 = vpop.xlane.xlu0 %1513
    %v1515 = vsel %vm241, %v1510, -inf
    %1516 = vmax.xlane.f32.xlu0 %v1515
    %v1517 = vpop.xlane.xlu0 %1516
    %v1518 = vsub.f32 %v1482, %v1514
    %v1519 = vsub.f32 %v1510, %v1517
    %v1520 = vmul.f32 %v1518, 1.442695
    %v1521 = vpow.pop %v1520
    %v1522 = vmul.f32 %v1519, 1.442695
    %v1523 = vpow.pop %v1522
    %v1524 = vsel %vm241, %v1521, 0.0
    %1525 = vadd.xlane.f32.xlu0 %v1524
    %v1526 = vpop.xlane.xlu0 %1525
    %v1527 = vsel %vm241, %v1523, 0.0
    %1528 = vadd.xlane.f32.xlu0 %v1527
    %v1529 = vpop.xlane.xlu0 %1528
    %v1530 = vrcp.pop %v1526
    %v1531 = vrcp.pop %v1529
    %v1532 = vmul.f32 %v1521, %v1530
    %v1533 = vmul.f32 %v1523, %v1531
    %1534 = vrot.lane.b32.xlu0 %v1309, 56
    %v1535 = vpop.permute.xlu0 %1534
    %v1538 = vsel %vm241, %v1532, 0
    %1540 = vmatpush.msra.mxu0 0.0
    %1541 = vmatpush.msra.mxu0 0.0
    %1542 = vmatpush.msra.mxu0 0.0
    %1543 = vmatpush.msra.mxu0 0.0
    %1544 = vmatpush.msra.mxu0 0.0
    %1545 = vmatpush.msra.mxu0 0.0
    %1546 = vmatpush.msra.mxu0 0.0
    %1547 = vmatpush.msra.mxu0 0.0
    %1548 = vmatpush.msra.mxu0 0.0
    %1549 = vmatpush.msra.mxu0 0.0
    %1550 = vmatpush.msra.mxu0 0.0
    %1551 = vmatpush.msra.mxu0 0.0
    %1552 = vmatpush.msra.mxu0 0.0
    %1553 = vmatpush.msra.mxu0 0.0
    %1554 = vmatpush.msra.mxu0 0.0
    %1555 = vmatpush.msra.mxu0 %v1535
    %1556 = vmatmul.f32.gmra.mxu0 %v1538
    %v1557 = vpop.f32.mrf.mxu0
    %v1558 = vadd.f32 0.0, %v1557
    %1559 = vdwg.mxu0
    %1560 = vrot.lane.b32.xlu0 %v1311, 56
    %v1561 = vpop.permute.xlu0 %1560
    %v1564 = vsel %vm241, %v1533, 0
    %1566 = vmatpush.msra.mxu0 0.0
    %1567 = vmatpush.msra.mxu0 0.0
    %1568 = vmatpush.msra.mxu0 0.0
    %1569 = vmatpush.msra.mxu0 0.0
    %1570 = vmatpush.msra.mxu0 0.0
    %1571 = vmatpush.msra.mxu0 0.0
    %1572 = vmatpush.msra.mxu0 0.0
    %1573 = vmatpush.msra.mxu0 0.0
    %1574 = vmatpush.msra.mxu0 0.0
    %1575 = vmatpush.msra.mxu0 0.0
    %1576 = vmatpush.msra.mxu0 0.0
    %1577 = vmatpush.msra.mxu0 0.0
    %1578 = vmatpush.msra.mxu0 0.0
    %1579 = vmatpush.msra.mxu0 0.0
    %1580 = vmatpush.msra.mxu0 0.0
    %1581 = vmatpush.msra.mxu0 %v1561
    %1582 = vmatmul.f32.gmra.mxu0 %v1564
    %v1583 = vpop.f32.mrf.mxu0
    %v1584 = vadd.f32 0.0, %v1583
    %1585 = vdwg.mxu0
    %1586 = vrot.lane.b32.xlu0 %v1316, 112
    %v1587 = vpop.permute.xlu0 %1586
    %1588 = vrot.lane.b32.xlu0 %v1322, 80
    %v1589 = vpop.permute.xlu0 %1588
    %v1590 = vsel %vm241, %v1587, 0
    %v1592 = vsel %vm241, %v1589, 0
    %1594 = vmatpush.xpose.msra.mxu0 0.0
    %1595 = vmatpush.xpose.msra.mxu0 0.0
    %1596 = vmatpush.xpose.msra.mxu0 0.0
    %1597 = vmatpush.xpose.msra.mxu0 0.0
    %1598 = vmatpush.xpose.msra.mxu0 0.0
    %1599 = vmatpush.xpose.msra.mxu0 0.0
    %1600 = vmatpush.xpose.msra.mxu0 0.0
    %1601 = vmatpush.xpose.msra.mxu0 0.0
    %1602 = vmatpush.xpose.msra.mxu0 0.0
    %1603 = vmatpush.xpose.msra.mxu0 0.0
    %1604 = vmatpush.xpose.msra.mxu0 0.0
    %1605 = vmatpush.xpose.msra.mxu0 0.0
    %1606 = vmatpush.xpose.msra.mxu0 0.0
    %1607 = vmatpush.xpose.msra.mxu0 0.0
    %1608 = vmatpush.xpose.msra.mxu0 0.0
    %1609 = vmatpush.xpose.msra.mxu0 %v1592
    %1610 = vmatmul.f32.gmra.mxu0 %v1590
    %v1611 = vpop.f32.mrf.mxu0
    %v1612 = vadd.f32 0.0, %v1611
    %1613 = vdwg.mxu0
    %1614 = vrot.lane.b32.xlu0 %v1317, 112
    %v1615 = vpop.permute.xlu0 %1614
    %1616 = vrot.lane.b32.xlu0 %v1323, 80
    %v1617 = vpop.permute.xlu0 %1616
    %v1618 = vsel %vm241, %v1615, 0
    %v1620 = vsel %vm241, %v1617, 0
    %1622 = vmatpush.xpose.msra.mxu0 0.0
    %1623 = vmatpush.xpose.msra.mxu0 0.0
    %1624 = vmatpush.xpose.msra.mxu0 0.0
    %1625 = vmatpush.xpose.msra.mxu0 0.0
    %1626 = vmatpush.xpose.msra.mxu0 0.0
    %1627 = vmatpush.xpose.msra.mxu0 0.0
    %1628 = vmatpush.xpose.msra.mxu0 0.0
    %1629 = vmatpush.xpose.msra.mxu0 0.0
    %1630 = vmatpush.xpose.msra.mxu0 0.0
    %1631 = vmatpush.xpose.msra.mxu0 0.0
    %1632 = vmatpush.xpose.msra.mxu0 0.0
    %1633 = vmatpush.xpose.msra.mxu0 0.0
    %1634 = vmatpush.xpose.msra.mxu0 0.0
    %1635 = vmatpush.xpose.msra.mxu0 0.0
    %1636 = vmatpush.xpose.msra.mxu0 0.0
    %1637 = vmatpush.xpose.msra.mxu0 %v1620
    %1638 = vmatmul.f32.gmra.mxu0 %v1618
    %v1639 = vpop.f32.mrf.mxu0
    %v1640 = vadd.f32 0.0, %v1639
    %1641 = vdwg.mxu0
    %v1642 = vsel %vm241, %v1612, -inf
    %1643 = vmax.xlane.f32.xlu0 %v1642
    %v1644 = vpop.xlane.xlu0 %1643
    %v1645 = vsel %vm241, %v1640, -inf
    %1646 = vmax.xlane.f32.xlu0 %v1645
    %v1647 = vpop.xlane.xlu0 %1646
    %v1648 = vsub.f32 %v1612, %v1644
    %v1649 = vsub.f32 %v1640, %v1647
    %v1650 = vmul.f32 %v1648, 1.442695
    %v1651 = vpow.pop %v1650
    %v1652 = vmul.f32 %v1649, 1.442695
    %v1653 = vpow.pop %v1652
    %v1654 = vsel %vm241, %v1651, 0.0
    %1655 = vadd.xlane.f32.xlu0 %v1654
    %v1656 = vpop.xlane.xlu0 %1655
    %v1657 = vsel %vm241, %v1653, 0.0
    %1658 = vadd.xlane.f32.xlu0 %v1657
    %v1659 = vpop.xlane.xlu0 %1658
    %v1660 = vrcp.pop %v1656
    %v1661 = vrcp.pop %v1659
    %v1662 = vmul.f32 %v1651, %v1660
    %v1663 = vmul.f32 %v1653, %v1661
    %1664 = vrot.lane.b32.xlu0 %v1309, 48
    %v1665 = vpop.permute.xlu0 %1664
    %v1668 = vsel %vm241, %v1662, 0
    %1670 = vmatpush.msra.mxu0 0.0
    %1671 = vmatpush.msra.mxu0 0.0
    %1672 = vmatpush.msra.mxu0 0.0
    %1673 = vmatpush.msra.mxu0 0.0
    %1674 = vmatpush.msra.mxu0 0.0
    %1675 = vmatpush.msra.mxu0 0.0
    %1676 = vmatpush.msra.mxu0 0.0
    %1677 = vmatpush.msra.mxu0 0.0
    %1678 = vmatpush.msra.mxu0 0.0
    %1679 = vmatpush.msra.mxu0 0.0
    %1680 = vmatpush.msra.mxu0 0.0
    %1681 = vmatpush.msra.mxu0 0.0
    %1682 = vmatpush.msra.mxu0 0.0
    %1683 = vmatpush.msra.mxu0 0.0
    %1684 = vmatpush.msra.mxu0 0.0
    %1685 = vmatpush.msra.mxu0 %v1665
    %1686 = vmatmul.f32.gmra.mxu0 %v1668
    %v1687 = vpop.f32.mrf.mxu0
    %v1688 = vadd.f32 0.0, %v1687
    %1689 = vdwg.mxu0
    %1690 = vrot.lane.b32.xlu0 %v1311, 48
    %v1691 = vpop.permute.xlu0 %1690
    %v1694 = vsel %vm241, %v1663, 0
    %1696 = vmatpush.msra.mxu0 0.0
    %1697 = vmatpush.msra.mxu0 0.0
    %1698 = vmatpush.msra.mxu0 0.0
    %1699 = vmatpush.msra.mxu0 0.0
    %1700 = vmatpush.msra.mxu0 0.0
    %1701 = vmatpush.msra.mxu0 0.0
    %1702 = vmatpush.msra.mxu0 0.0
    %1703 = vmatpush.msra.mxu0 0.0
    %1704 = vmatpush.msra.mxu0 0.0
    %1705 = vmatpush.msra.mxu0 0.0
    %1706 = vmatpush.msra.mxu0 0.0
    %1707 = vmatpush.msra.mxu0 0.0
    %1708 = vmatpush.msra.mxu0 0.0
    %1709 = vmatpush.msra.mxu0 0.0
    %1710 = vmatpush.msra.mxu0 0.0
    %1711 = vmatpush.msra.mxu0 %v1691
    %1712 = vmatmul.f32.gmra.mxu0 %v1694
    %v1713 = vpop.f32.mrf.mxu0
    %v1714 = vadd.f32 0.0, %v1713
    %1715 = vdwg.mxu0
    %1716 = vrot.lane.b32.xlu0 %v1316, 104
    %v1717 = vpop.permute.xlu0 %1716
    %1718 = vrot.lane.b32.xlu0 %v1322, 72
    %v1719 = vpop.permute.xlu0 %1718
    %v1720 = vsel %vm241, %v1717, 0
    %v1722 = vsel %vm241, %v1719, 0
    %1724 = vmatpush.xpose.msra.mxu0 0.0
    %1725 = vmatpush.xpose.msra.mxu0 0.0
    %1726 = vmatpush.xpose.msra.mxu0 0.0
    %1727 = vmatpush.xpose.msra.mxu0 0.0
    %1728 = vmatpush.xpose.msra.mxu0 0.0
    %1729 = vmatpush.xpose.msra.mxu0 0.0
    %1730 = vmatpush.xpose.msra.mxu0 0.0
    %1731 = vmatpush.xpose.msra.mxu0 0.0
    %1732 = vmatpush.xpose.msra.mxu0 0.0
    %1733 = vmatpush.xpose.msra.mxu0 0.0
    %1734 = vmatpush.xpose.msra.mxu0 0.0
    %1735 = vmatpush.xpose.msra.mxu0 0.0
    %1736 = vmatpush.xpose.msra.mxu0 0.0
    %1737 = vmatpush.xpose.msra.mxu0 0.0
    %1738 = vmatpush.xpose.msra.mxu0 0.0
    %1739 = vmatpush.xpose.msra.mxu0 %v1722
    %1740 = vmatmul.f32.gmra.mxu0 %v1720
    %v1741 = vpop.f32.mrf.mxu0
    %v1742 = vadd.f32 0.0, %v1741
    %1743 = vdwg.mxu0
    %1744 = vrot.lane.b32.xlu0 %v1317, 104
    %v1745 = vpop.permute.xlu0 %1744
    %1746 = vrot.lane.b32.xlu0 %v1323, 72
    %v1747 = vpop.permute.xlu0 %1746
    %v1748 = vsel %vm241, %v1745, 0
    %v1750 = vsel %vm241, %v1747, 0
    %1752 = vmatpush.xpose.msra.mxu0 0.0
    %1753 = vmatpush.xpose.msra.mxu0 0.0
    %1754 = vmatpush.xpose.msra.mxu0 0.0
    %1755 = vmatpush.xpose.msra.mxu0 0.0
    %1756 = vmatpush.xpose.msra.mxu0 0.0
    %1757 = vmatpush.xpose.msra.mxu0 0.0
    %1758 = vmatpush.xpose.msra.mxu0 0.0
    %1759 = vmatpush.xpose.msra.mxu0 0.0
    %1760 = vmatpush.xpose.msra.mxu0 0.0
    %1761 = vmatpush.xpose.msra.mxu0 0.0
    %1762 = vmatpush.xpose.msra.mxu0 0.0
    %1763 = vmatpush.xpose.msra.mxu0 0.0
    %1764 = vmatpush.xpose.msra.mxu0 0.0
    %1765 = vmatpush.xpose.msra.mxu0 0.0
    %1766 = vmatpush.xpose.msra.mxu0 0.0
    %1767 = vmatpush.xpose.msra.mxu0 %v1750
    %1768 = vmatmul.f32.gmra.mxu0 %v1748
    %v1769 = vpop.f32.mrf.mxu0
    %v1770 = vadd.f32 0.0, %v1769
    %1771 = vdwg.mxu0
    %v1772 = vsel %vm241, %v1742, -inf
    %1773 = vmax.xlane.f32.xlu0 %v1772
    %v1774 = vpop.xlane.xlu0 %1773
    %v1775 = vsel %vm241, %v1770, -inf
    %1776 = vmax.xlane.f32.xlu0 %v1775
    %v1777 = vpop.xlane.xlu0 %1776
    %v1778 = vsub.f32 %v1742, %v1774
    %v1779 = vsub.f32 %v1770, %v1777
    %v1780 = vmul.f32 %v1778, 1.442695
    %v1781 = vpow.pop %v1780
    %v1782 = vmul.f32 %v1779, 1.442695
    %v1783 = vpow.pop %v1782
    %v1784 = vsel %vm241, %v1781, 0.0
    %1785 = vadd.xlane.f32.xlu0 %v1784
    %v1786 = vpop.xlane.xlu0 %1785
    %v1787 = vsel %vm241, %v1783, 0.0
    %1788 = vadd.xlane.f32.xlu0 %v1787
    %v1789 = vpop.xlane.xlu0 %1788
    %v1790 = vrcp.pop %v1786
    %v1791 = vrcp.pop %v1789
    %v1792 = vmul.f32 %v1781, %v1790
    %v1793 = vmul.f32 %v1783, %v1791
    %1794 = vrot.lane.b32.xlu0 %v1309, 40
    %v1795 = vpop.permute.xlu0 %1794
    %v1798 = vsel %vm241, %v1792, 0
    %1800 = vmatpush.msra.mxu0 0.0
    %1801 = vmatpush.msra.mxu0 0.0
    %1802 = vmatpush.msra.mxu0 0.0
    %1803 = vmatpush.msra.mxu0 0.0
    %1804 = vmatpush.msra.mxu0 0.0
    %1805 = vmatpush.msra.mxu0 0.0
    %1806 = vmatpush.msra.mxu0 0.0
    %1807 = vmatpush.msra.mxu0 0.0
    %1808 = vmatpush.msra.mxu0 0.0
    %1809 = vmatpush.msra.mxu0 0.0
    %1810 = vmatpush.msra.mxu0 0.0
    %1811 = vmatpush.msra.mxu0 0.0
    %1812 = vmatpush.msra.mxu0 0.0
    %1813 = vmatpush.msra.mxu0 0.0
    %1814 = vmatpush.msra.mxu0 0.0
    %1815 = vmatpush.msra.mxu0 %v1795
    %1816 = vmatmul.f32.gmra.mxu0 %v1798
    %v1817 = vpop.f32.mrf.mxu0
    %v1818 = vadd.f32 0.0, %v1817
    %1819 = vdwg.mxu0
    %1820 = vrot.lane.b32.xlu0 %v1311, 40
    %v1821 = vpop.permute.xlu0 %1820
    %v1824 = vsel %vm241, %v1793, 0
    %1826 = vmatpush.msra.mxu0 0.0
    %1827 = vmatpush.msra.mxu0 0.0
    %1828 = vmatpush.msra.mxu0 0.0
    %1829 = vmatpush.msra.mxu0 0.0
    %1830 = vmatpush.msra.mxu0 0.0
    %1831 = vmatpush.msra.mxu0 0.0
    %1832 = vmatpush.msra.mxu0 0.0
    %1833 = vmatpush.msra.mxu0 0.0
    %1834 = vmatpush.msra.mxu0 0.0
    %1835 = vmatpush.msra.mxu0 0.0
    %1836 = vmatpush.msra.mxu0 0.0
    %1837 = vmatpush.msra.mxu0 0.0
    %1838 = vmatpush.msra.mxu0 0.0
    %1839 = vmatpush.msra.mxu0 0.0
    %1840 = vmatpush.msra.mxu0 0.0
    %1841 = vmatpush.msra.mxu0 %v1821
    %1842 = vmatmul.f32.gmra.mxu0 %v1824
    %v1843 = vpop.f32.mrf.mxu0
    %v1844 = vadd.f32 0.0, %v1843
    %1845 = vdwg.mxu0
    %1848 = vrot.lane.b32.xlu0 %v1558, 8
    %v1849 = vpop.permute.xlu0 %1848
    %1850 = vrot.lane.b32.xlu0 %v1584, 8
    %v1851 = vpop.permute.xlu0 %1850
    %1856 = vrot.lane.b32.xlu0 %v1688, 16
    %v1857 = vpop.permute.xlu0 %1856
    %1858 = vrot.lane.b32.xlu0 %v1714, 16
    %v1859 = vpop.permute.xlu0 %1858
    %1864 = vrot.lane.b32.xlu0 %v1818, 24
    %v1865 = vpop.permute.xlu0 %1864
    %1866 = vrot.lane.b32.xlu0 %v1844, 24
    %v1867 = vpop.permute.xlu0 %1866
    %v1870 = vsel %vm241, %v1427, %v1849
    %v1871 = vsel %vm241, %v1454, %v1851
    %v1872 = vsel %vm787, %v1870, %v1857
    %v1873 = vsel %vm787, %v1871, %v1859
    %v1874 = vsel %vm790, %v1872, %v1865
    %v1875 = vsel %vm790, %v1873, %v1867
    %v1876 = vpack.c.bf16 %v1875, %v1874
    %v1877 = vperm.slane %v1241, 0
    %v1882 = vunpack.c.l.b16 %v1192
    %v1883 = vunpack.c.l.b16 %v1193
    %v1884 = vunpack.c.l.b16 %v1194
    %v1885 = vunpack.c.l.b16 %v1195
    %v1886 = vpack.c.b16 %v1883, %v1882
    %v1887 = vpack.c.b16 %v1885, %v1884
    %v1891 = vsel %vm153, %v1876, 0
    %1893 = vmatpush.bf16.msra.mxu0 0
    %1894 = vmatpush.bf16.msra.mxu0 0
    %1895 = vmatpush.bf16.msra.mxu0 0
    %1896 = vmatpush.bf16.msra.mxu0 0
    %1897 = vmatpush.bf16.msra.mxu0 0
    %1898 = vmatpush.bf16.msra.mxu0 0
    %1899 = vmatpush.bf16.msra.mxu0 %v1887
    %1900 = vmatpush.bf16.msra.mxu0 %v1886
    %1901 = vmatmul.bf16.gmra.mxu0 %v1891
    %v1902 = vpop.f32.mrf.mxu0
    %v1903 = vadd.f32 %v1877, %v1902
    %v1904 = vpop.f32.mrf.mxu0
    %v1905 = vadd.f32 %v1877, %v1904
    %1906 = vdwg.mxu0
    %v1907 = vadd.f32 %v1185, %v1903
    %v1908 = vadd.f32 %v1186, %v1905
    %v1909 = vmul.f32 %v1907, %v1907
    %v1910 = vmul.f32 %v1908, %v1908
    %v1911 = vsel %vm153, %v1909, 0.0
    %1912 = vadd.xlane.f32.xlu0 %v1911
    %v1913 = vpop.xlane.xlu0 %1912
    %v1914 = vsel %vm153, %v1910, 0.0
    %1915 = vadd.xlane.f32.xlu0 %v1914
    %v1916 = vpop.xlane.xlu0 %1915
    %v1917 = vmul.f32 %v1913, %v166
    %v1918 = vmul.f32 %v1916, %v166
    %v1919 = vadd.f32 %v1917, 1e-06
    %v1920 = vadd.f32 %v1918, 1e-06
    %v1921 = vrsqrt.pop %v1919
    %v1922 = vmul.f32 %v1921, %v1919
    %v1923 = vmul.f32 %v1922, %v1921
    %v1924 = vmul.f32 0.5, %v1923
    %v1925 = vsub.f32 1.5, %v1924
    %v1926 = vmul.f32 %v1921, %v1925
    %vm1927 = vweird.f32 %v1919
    %vm1928 = vweird.f32 %v1921
    %vm1929 = vmor %vm1927, %vm1928
    %v1930 = vsel %vm1929, %v1921, %v1926
    %v1931 = vrsqrt.pop %v1920
    %v1932 = vmul.f32 %v1931, %v1920
    %v1933 = vmul.f32 %v1932, %v1931
    %v1934 = vmul.f32 0.5, %v1933
    %v1935 = vsub.f32 1.5, %v1934
    %v1936 = vmul.f32 %v1931, %v1935
    %vm1937 = vweird.f32 %v1920
    %vm1938 = vweird.f32 %v1931
    %vm1939 = vmor %vm1937, %vm1938
    %v1940 = vsel %vm1939, %v1931, %v1936
    %v1941 = vmul.f32 %v1907, %v1930
    %v1942 = vmul.f32 %v1908, %v1940
    %v1943 = vperm.slane %v1238, 0
    %v1944 = vmul.f32 %v1943, %v1941
    %v1945 = vmul.f32 %v1943, %v1942
    %v1946 = vpack.c.bf16 %v1945, %v1944
    %v1948 = vperm.slane %v1243, 0
    %v1949 = vperm.slane %v1243, 1
    %v1950 = vperm.slane %v1243, 2
    %v1951 = vperm.slane %v1243, 3
    %v1964 = vunpack.c.l.b16 %v1196
    %v1965 = vunpack.c.h.b16 %v1196
    %v1966 = vunpack.c.l.b16 %v1197
    %v1967 = vunpack.c.h.b16 %v1197
    %v1968 = vunpack.c.l.b16 %v1198
    %v1969 = vunpack.c.h.b16 %v1198
    %v1970 = vunpack.c.l.b16 %v1199
    %v1971 = vunpack.c.h.b16 %v1199
    %v1972 = vunpack.c.l.b16 %v1200
    %v1973 = vunpack.c.h.b16 %v1200
    %v1974 = vunpack.c.l.b16 %v1201
    %v1975 = vunpack.c.h.b16 %v1201
    %v1976 = vunpack.c.l.b16 %v1202
    %v1977 = vunpack.c.h.b16 %v1202
    %v1978 = vunpack.c.l.b16 %v1203
    %v1979 = vunpack.c.h.b16 %v1203
    %v1980 = vpack.c.b16 %v1968, %v1964
    %v1981 = vpack.c.b16 %v1969, %v1965
    %v1982 = vpack.c.b16 %v1970, %v1966
    %v1983 = vpack.c.b16 %v1971, %v1967
    %v1984 = vpack.c.b16 %v1976, %v1972
    %v1985 = vpack.c.b16 %v1977, %v1973
    %v1986 = vpack.c.b16 %v1978, %v1974
    %v1987 = vpack.c.b16 %v1979, %v1975
    %v1997 = vsel %vm153, %v1946, 0
    %1999 = vmatpush.bf16.msra.mxu0 0
    %2000 = vmatpush.bf16.msra.mxu0 0
    %2001 = vmatpush.bf16.msra.mxu0 0
    %2002 = vmatpush.bf16.msra.mxu0 0
    %2003 = vmatpush.bf16.msra.mxu0 0
    %2004 = vmatpush.bf16.msra.mxu0 0
    %2005 = vmatpush.bf16.msra.mxu0 %v1984
    %2006 = vmatpush.bf16.msra.mxu0 %v1980
    %2007 = vmatmul.bf16.gmra.mxu0 %v1997
    %v2008 = vpop.f32.mrf.mxu0
    %v2009 = vadd.f32 %v1948, %v2008
    %v2010 = vpop.f32.mrf.mxu0
    %v2011 = vadd.f32 %v1948, %v2010
    %2012 = vdwg.mxu0
    %2013 = vmatpush.bf16.msra.mxu0 0
    %2014 = vmatpush.bf16.msra.mxu0 0
    %2015 = vmatpush.bf16.msra.mxu0 0
    %2016 = vmatpush.bf16.msra.mxu0 0
    %2017 = vmatpush.bf16.msra.mxu0 0
    %2018 = vmatpush.bf16.msra.mxu0 0
    %2019 = vmatpush.bf16.msra.mxu0 %v1985
    %2020 = vmatpush.bf16.msra.mxu0 %v1981
    %2021 = vmatmul.bf16.gmra.mxu0 %v1997
    %v2022 = vpop.f32.mrf.mxu0
    %v2023 = vadd.f32 %v1949, %v2022
    %v2024 = vpop.f32.mrf.mxu0
    %v2025 = vadd.f32 %v1949, %v2024
    %2026 = vdwg.mxu0
    %2027 = vmatpush.bf16.msra.mxu0 0
    %2028 = vmatpush.bf16.msra.mxu0 0
    %2029 = vmatpush.bf16.msra.mxu0 0
    %2030 = vmatpush.bf16.msra.mxu0 0
    %2031 = vmatpush.bf16.msra.mxu0 0
    %2032 = vmatpush.bf16.msra.mxu0 0
    %2033 = vmatpush.bf16.msra.mxu0 %v1986
    %2034 = vmatpush.bf16.msra.mxu0 %v1982
    %2035 = vmatmul.bf16.gmra.mxu0 %v1997
    %v2036 = vpop.f32.mrf.mxu0
    %v2037 = vadd.f32 %v1950, %v2036
    %v2038 = vpop.f32.mrf.mxu0
    %v2039 = vadd.f32 %v1950, %v2038
    %2040 = vdwg.mxu0
    %2041 = vmatpush.bf16.msra.mxu0 0
    %2042 = vmatpush.bf16.msra.mxu0 0
    %2043 = vmatpush.bf16.msra.mxu0 0
    %2044 = vmatpush.bf16.msra.mxu0 0
    %2045 = vmatpush.bf16.msra.mxu0 0
    %2046 = vmatpush.bf16.msra.mxu0 0
    %2047 = vmatpush.bf16.msra.mxu0 %v1987
    %2048 = vmatpush.bf16.msra.mxu0 %v1983
    %2049 = vmatmul.bf16.gmra.mxu0 %v1997
    %v2050 = vpop.f32.mrf.mxu0
    %v2051 = vadd.f32 %v1951, %v2050
    %v2052 = vpop.f32.mrf.mxu0
    %v2053 = vadd.f32 %v1951, %v2052
    %2054 = vdwg.mxu0
    %v2055 = vxor.u32 %v2009, 2147483648
    %v2056 = vxor.u32 %v2023, 2147483648
    %v2057 = vxor.u32 %v2011, 2147483648
    %v2058 = vxor.u32 %v2025, 2147483648
    %v2059 = vmul.f32 %v2055, 1.442695
    %v2060 = vpow.pop %v2059
    %v2061 = vmul.f32 %v2056, 1.442695
    %v2062 = vpow.pop %v2061
    %v2063 = vmul.f32 %v2057, 1.442695
    %v2064 = vpow.pop %v2063
    %v2065 = vmul.f32 %v2058, 1.442695
    %v2066 = vpow.pop %v2065
    %v2067 = vadd.f32 %v2060, 1.0
    %v2068 = vadd.f32 %v2062, 1.0
    %v2069 = vadd.f32 %v2064, 1.0
    %v2070 = vadd.f32 %v2066, 1.0
    %v2071 = vrcp.pop %v2067
    %v2072 = vmul.f32 %v2067, %v2071
    %v2073 = vsub.f32 1.0, %v2072
    %v2074 = vmul.f32 %v2071, %v2073
    %v2075 = vadd.f32 %v2071, %v2074
    %vm2076 = vweird.f32 %v2067
    %vm2077 = vweird.f32 %v2071
    %vm2078 = vmor %vm2076, %vm2077
    %v2079 = vsel %vm2078, %v2071, %v2075
    %v2080 = vand.u32 2147483647, %v2067
    %vm2081 = vcmp.eq.f32.partialorder %v2080, 8.507059e+37
    %v2082 = vand.u32 %v2067, 2147483648
    %v2083 = vor.u32 1.1754944e-38, %v2082
    %v2084 = vsel %vm2081, %v2083, %v2079
    %v2085 = vmul.f32 1.0, %v2084
    %v2086 = vrcp.pop %v2068
    %v2087 = vmul.f32 %v2068, %v2086
    %v2088 = vsub.f32 1.0, %v2087
    %v2089 = vmul.f32 %v2086, %v2088
    %v2090 = vadd.f32 %v2086, %v2089
    %vm2091 = vweird.f32 %v2068
    %vm2092 = vweird.f32 %v2086
    %vm2093 = vmor %vm2091, %vm2092
    %v2094 = vsel %vm2093, %v2086, %v2090
    %v2095 = vand.u32 2147483647, %v2068
    %vm2096 = vcmp.eq.f32.partialorder %v2095, 8.507059e+37
    %v2097 = vand.u32 %v2068, 2147483648
    %v2098 = vor.u32 1.1754944e-38, %v2097
    %v2099 = vsel %vm2096, %v2098, %v2094
    %v2100 = vmul.f32 1.0, %v2099
    %v2101 = vrcp.pop %v2069
    %v2102 = vmul.f32 %v2069, %v2101
    %v2103 = vsub.f32 1.0, %v2102
    %v2104 = vmul.f32 %v2101, %v2103
    %v2105 = vadd.f32 %v2101, %v2104
    %vm2106 = vweird.f32 %v2069
    %vm2107 = vweird.f32 %v2101
    %vm2108 = vmor %vm2106, %vm2107
    %v2109 = vsel %vm2108, %v2101, %v2105
    %v2110 = vand.u32 2147483647, %v2069
    %vm2111 = vcmp.eq.f32.partialorder %v2110, 8.507059e+37
    %v2112 = vand.u32 %v2069, 2147483648
    %v2113 = vor.u32 1.1754944e-38, %v2112
    %v2114 = vsel %vm2111, %v2113, %v2109
    %v2115 = vmul.f32 1.0, %v2114
    %v2116 = vrcp.pop %v2070
    %v2117 = vmul.f32 %v2070, %v2116
    %v2118 = vsub.f32 1.0, %v2117
    %v2119 = vmul.f32 %v2116, %v2118
    %v2120 = vadd.f32 %v2116, %v2119
    %vm2121 = vweird.f32 %v2070
    %vm2122 = vweird.f32 %v2116
    %vm2123 = vmor %vm2121, %vm2122
    %v2124 = vsel %vm2123, %v2116, %v2120
    %v2125 = vand.u32 2147483647, %v2070
    %vm2126 = vcmp.eq.f32.partialorder %v2125, 8.507059e+37
    %v2127 = vand.u32 %v2070, 2147483648
    %v2128 = vor.u32 1.1754944e-38, %v2127
    %v2129 = vsel %vm2126, %v2128, %v2124
    %v2130 = vmul.f32 1.0, %v2129
    %v2131 = vmul.f32 %v2009, %v2085
    %v2132 = vmul.f32 %v2023, %v2100
    %v2133 = vmul.f32 %v2011, %v2115
    %v2134 = vmul.f32 %v2025, %v2130
    %v2135 = vmul.f32 %v2131, %v2037
    %v2136 = vmul.f32 %v2132, %v2051
    %v2137 = vmul.f32 %v2133, %v2039
    %v2138 = vmul.f32 %v2134, %v2053
    %v2139 = vpack.c.bf16 %v2137, %v2135
    %v2140 = vpack.c.bf16 %v2138, %v2136
    %v2173 = vunpack.c.l.b16 %v1205
    %v2174 = vunpack.c.l.b16 %v1206
    %v2175 = vunpack.c.l.b16 %v1207
    %v2176 = vunpack.c.l.b16 %v1208
    %v2177 = vunpack.c.l.b16 %v1209
    %v2178 = vunpack.c.l.b16 %v1210
    %v2179 = vunpack.c.l.b16 %v1211
    %v2180 = vunpack.c.l.b16 %v1212
    %v2181 = vunpack.c.l.b16 %v1213
    %v2182 = vunpack.c.l.b16 %v1214
    %v2183 = vunpack.c.l.b16 %v1215
    %v2184 = vunpack.c.l.b16 %v1216
    %v2185 = vunpack.c.l.b16 %v1217
    %v2186 = vunpack.c.l.b16 %v1218
    %v2187 = vunpack.c.l.b16 %v1219
    %v2188 = vunpack.c.l.b16 %v1220
    %v2189 = vunpack.c.l.b16 %v1221
    %v2190 = vunpack.c.l.b16 %v1222
    %v2191 = vunpack.c.l.b16 %v1223
    %v2192 = vunpack.c.l.b16 %v1224
    %v2193 = vunpack.c.l.b16 %v1225
    %v2194 = vunpack.c.l.b16 %v1226
    %v2195 = vunpack.c.l.b16 %v1227
    %v2196 = vunpack.c.l.b16 %v1228
    %v2197 = vunpack.c.l.b16 %v1229
    %v2198 = vunpack.c.l.b16 %v1230
    %v2199 = vunpack.c.l.b16 %v1231
    %v2200 = vunpack.c.l.b16 %v1232
    %v2201 = vunpack.c.l.b16 %v1233
    %v2202 = vunpack.c.l.b16 %v1234
    %v2203 = vunpack.c.l.b16 %v1235
    %v2204 = vunpack.c.l.b16 %v1236
    %v2205 = vpack.c.b16 %v2174, %v2173
    %v2206 = vpack.c.b16 %v2176, %v2175
    %v2207 = vpack.c.b16 %v2178, %v2177
    %v2208 = vpack.c.b16 %v2180, %v2179
    %v2209 = vpack.c.b16 %v2182, %v2181
    %v2210 = vpack.c.b16 %v2184, %v2183
    %v2211 = vpack.c.b16 %v2186, %v2185
    %v2212 = vpack.c.b16 %v2188, %v2187
    %v2213 = vpack.c.b16 %v2190, %v2189
    %v2214 = vpack.c.b16 %v2192, %v2191
    %v2215 = vpack.c.b16 %v2194, %v2193
    %v2216 = vpack.c.b16 %v2196, %v2195
    %v2217 = vpack.c.b16 %v2198, %v2197
    %v2218 = vpack.c.b16 %v2200, %v2199
    %v2219 = vpack.c.b16 %v2202, %v2201
    %v2220 = vpack.c.b16 %v2204, %v2203
    %2237 = vmatpush.bf16.msra.mxu0 %v2212
    %2238 = vmatpush.bf16.msra.mxu0 %v2211
    %2239 = vmatpush.bf16.msra.mxu0 %v2210
    %2240 = vmatpush.bf16.msra.mxu0 %v2209
    %2241 = vmatpush.bf16.msra.mxu0 %v2208
    %2242 = vmatpush.bf16.msra.mxu0 %v2207
    %2243 = vmatpush.bf16.msra.mxu0 %v2206
    %2244 = vmatpush.bf16.msra.mxu0 %v2205
    %2245 = vmatmul.bf16.gmra.mxu0 %v2139
    %v2246 = vpop.f32.mrf.mxu0
    %v2247 = vadd.f32 0.0, %v2246
    %v2248 = vpop.f32.mrf.mxu0
    %v2249 = vadd.f32 0.0, %v2248
    %2250 = vdwg.mxu0
    %2251 = vmatpush.bf16.msra.mxu0 %v2220
    %2252 = vmatpush.bf16.msra.mxu0 %v2219
    %2253 = vmatpush.bf16.msra.mxu0 %v2218
    %2254 = vmatpush.bf16.msra.mxu0 %v2217
    %2255 = vmatpush.bf16.msra.mxu0 %v2216
    %2256 = vmatpush.bf16.msra.mxu0 %v2215
    %2257 = vmatpush.bf16.msra.mxu0 %v2214
    %2258 = vmatpush.bf16.msra.mxu0 %v2213
    %2259 = vmatmul.bf16.gmra.mxu0 %v2140
    %v2260 = vpop.f32.mrf.mxu0
    %v2261 = vadd.f32 %v2247, %v2260
    %v2262 = vpop.f32.mrf.mxu0
    %v2263 = vadd.f32 %v2249, %v2262
    %2264 = vdwg.mxu0
    %v2265 = vadd.f32 %v1907, %v2261
    %v2266 = vadd.f32 %v1908, %v2263
    %v2267 = vperm.slane %v1244, 0
    %v2268 = vadd.f32 %v2265, %v2267
    %v2269 = vadd.f32 %v2266, %v2267
    %v2270 = vld [vmem:[%s6] sm:$0x1]
    %v2271 = vld [vmem:[%s6 + $0x1] sm:$0x1]
    %v2272 = vmul.f32 %v2268, %v2268
    %v2273 = vmul.f32 %v2269, %v2269
    %v2274 = vsel %vm153, %v2272, 0.0
    %2275 = vadd.xlane.f32.xlu0 %v2274
    %v2276 = vpop.xlane.xlu0 %2275
    %v2277 = vsel %vm153, %v2273, 0.0
    %2278 = vadd.xlane.f32.xlu0 %v2277
    %v2279 = vpop.xlane.xlu0 %2278
    %v2280 = vmul.f32 %v2276, %v166
    %v2281 = vmul.f32 %v2279, %v166
    %v2282 = vadd.f32 %v2280, 1e-06
    %v2283 = vadd.f32 %v2281, 1e-06
    %v2284 = vrsqrt.pop %v2282
    %v2285 = vmul.f32 %v2284, %v2282
    %v2286 = vmul.f32 %v2285, %v2284
    %v2287 = vmul.f32 0.5, %v2286
    %v2288 = vsub.f32 1.5, %v2287
    %v2289 = vmul.f32 %v2284, %v2288
    %vm2290 = vweird.f32 %v2282
    %vm2291 = vweird.f32 %v2284
    %vm2292 = vmor %vm2290, %vm2291
    %v2293 = vsel %vm2292, %v2284, %v2289
    %v2294 = vrsqrt.pop %v2283
    %v2295 = vmul.f32 %v2294, %v2283
    %v2296 = vmul.f32 %v2295, %v2294
    %v2297 = vmul.f32 0.5, %v2296
    %v2298 = vsub.f32 1.5, %v2297
    %v2299 = vmul.f32 %v2294, %v2298
    %vm2300 = vweird.f32 %v2283
    %vm2301 = vweird.f32 %v2294
    %vm2302 = vmor %vm2300, %vm2301
    %v2303 = vsel %vm2302, %v2294, %v2299
    %v2304 = vmul.f32 %v2268, %v2293
    %v2305 = vmul.f32 %v2269, %v2303
    %v2307 = vperm.slane %v2270, 0
    %v2309 = vmul.f32 %v2307, %v2304
    %v2310 = vmul.f32 %v2307, %v2305
    %v2311 = vpack.c.bf16 %v2310, %v2309
    %v2312 = vld [vmem:[%s5] sm:$0xf]
    %v2313 = vld [vmem:[%s5 + $0x4] sm:$0xf]
    %v2314 = vld [vmem:[%s5 + $0x8] sm:$0xf]
    %v2315 = vld [vmem:[%s5 + $0xc] sm:$0xf]
    %v2317 = vperm.slane %v2271, 0
    %v2323 = vunpack.c.l.b16 %v2312
    %v2324 = vunpack.c.l.b16 %v2313
    %v2325 = vunpack.c.l.b16 %v2314
    %v2326 = vunpack.c.l.b16 %v2315
    %v2327 = vpack.c.b16 %v2324, %v2323
    %v2328 = vpack.c.b16 %v2326, %v2325
    %v2332 = vsel %vm153, %v2311, 0
    %2334 = vmatpush.bf16.msra.mxu0 0
    %2335 = vmatpush.bf16.msra.mxu0 0
    %2336 = vmatpush.bf16.msra.mxu0 0
    %2337 = vmatpush.bf16.msra.mxu0 0
    %2338 = vmatpush.bf16.msra.mxu0 0
    %2339 = vmatpush.bf16.msra.mxu0 0
    %2340 = vmatpush.bf16.msra.mxu0 %v2328
    %2341 = vmatpush.bf16.msra.mxu0 %v2327
    %2342 = vmatmul.bf16.gmra.mxu0 %v2332
    %v2343 = vpop.f32.mrf.mxu0
    %v2344 = vadd.f32 %v2317, %v2343
    %v2345 = vpop.f32.mrf.mxu0
    %v2346 = vadd.f32 %v2317, %v2345
    %2347 = vdwg.mxu0
    %2348 = vst [vmem:[#allocation2] sm:$0xff] %v2344
    %2349 = vst [vmem:[#allocation2 + $0x8] sm:$0xff] %v2346
    // Predicated region
    $region30: #{transformer_forward.1} parent=1 // pred_check
      _
    $region31: #{transformer_forward.1} parent=1 // pred_check_branch
      %2351 = sbr.rel (0) target = $region33
    $region32: #{transformer_forward.1} parent=1 // pred_region
      %2353 = vsyncadd [#allocation3], 0
      %s2354 = sshll.u32 [#allocation2], 4
      %s2355 = int_to_ptr.vmem [resolvable:$true] %s2354
      %s2356 = sshll.u32 %s7, 4
      %s2357 = int_to_ptr.hbm [resolvable:$true] %s2356
      %2362 = dma.vmem_to_hbm [thread:$0]  %s2355, 256, %s2357, [#allocation3], 128, 128, 8
    $region33: #{transformer_forward.1} parent=1 // pred_fallthru
      _
    // Predicated region
    $region34: #{transformer_forward.1} parent=1 // pred_check
      _
    $region35: #{transformer_forward.1} parent=1 // pred_check_branch
      %2364 = sbr.rel (0) target = $region37
    $region36: #{transformer_forward.1} parent=1 // pred_region
      %2366 = dma.done [#allocation3], 256
    $region37: #{transformer_forward.1} parent=1 // pred_fallthru
      _
    %2367 = vsyncpa [#allocation3], 1

</llo_original>
